<compile_context>
chip_gen: v5e
topology: v5e:2x2
jax: 0.10.0
libtpu: 0.0.40
codegen_flags: <defaults>
</compile_context>

<pallas_src>
import math

import jax
import jax.numpy as jnp
from jax.experimental import pallas as pl
from jax.experimental.pallas import tpu as pltpu

# ----------------------------- configuration --------------------------------
VOCAB = 100
MAX_POS = 16
HIDDEN = 32
NUM_HEADS = 2
HEAD_DIM = HIDDEN // NUM_HEADS
INTER = 64
NUM_LAYERS = 2
NUM_TOPICS = 10
NUM_SENT = 3
BATCH = 2
SEQ = 8
LN_EPS = 1e-12  # BERT default

VMEM_SPEC = pl.BlockSpec(memory_space=pltpu.MemorySpace.VMEM)


# ----------------------------- kernel helpers --------------------------------
def _layernorm(x, gamma, beta, eps=LN_EPS):
    mu = jnp.mean(x, axis=-1, keepdims=True)
    var = jnp.mean((x - mu) ** 2, axis=-1, keepdims=True)
    return (x - mu) * jax.lax.rsqrt(var + eps) * gamma + beta


def _gelu(x):
    # TODO(synk): HF BERT default uses exact erf-GELU; tanh approximation used here.
    c = math.sqrt(2.0 / math.pi)
    return 0.5 * x * (1.0 + jnp.tanh(c * (x + 0.044715 * x * x * x)))


# ------------------------------- fused kernel ---------------------------------
def bert_forward_kernel(ids_ref, tt_ref, mask_ref,
                        wemb_ref, pemb_ref, temb_ref, eg_ref, eb_ref,
                        wqkv_ref, bqkv_ref, wo_ref, bo_ref,
                        ln1g_ref, ln1b_ref,
                        w1_ref, b1_ref, w2_ref, b2_ref,
                        ln2g_ref, ln2b_ref,
                        pw_ref, pb_ref, hw_ref, hb_ref,
                        out_ref):
    B, S = mask_ref.shape
    BS = B * S
    V, H = wemb_ref.shape
    n_layers = wqkv_ref.shape[0]
    D = H // NUM_HEADS
    scale = 1.0 / math.sqrt(D)

    # ---- embeddings: token gather as one-hot matmul on the MXU -------------
    ids = ids_ref[...]                                            # (BS, 1) int32
    v_iota = jax.lax.broadcasted_iota(jnp.int32, (BS, V), 1)
    onehot = (ids == v_iota).astype(jnp.float32)                  # (BS, V)
    word = jnp.dot(onehot, wemb_ref[...],
                   preferred_element_type=jnp.float32)            # (BS, H)

    pos = jnp.broadcast_to(pemb_ref[0:S, :][None], (B, S, H)).reshape(BS, H)

    tt = tt_ref[...]                                              # (BS, 1) int32
    type_e = jnp.where(tt == 0, temb_ref[0:1, :], temb_ref[1:2, :])

    x = _layernorm(word + pos + type_e, eg_ref[...], eb_ref[...])  # (BS, H)

    # ---- additive attention mask bias, hoisted out of the layer loop -------
    neg = (1.0 - mask_ref[...]) * (-10000.0)                      # (B, S)
    bias = neg[:, None, :]                                        # (B, 1, S)

    # ---- encoder layers: statically unrolled, weights resident in VMEM -----
    for l in range(n_layers):
        qkv = jnp.dot(x, wqkv_ref[l],
                      preferred_element_type=jnp.float32) + bqkv_ref[l]  # (BS, 3H)
        wo_l = wo_ref[l]
        attn = jnp.zeros((BS, H), jnp.float32)
        for h in range(NUM_HEADS):   # tiny static unroll; single-batch-dim einsums
            qh = qkv[:, h * D:(h + 1) * D].reshape(B, S, D)
            kh = qkv[:, H + h * D:H + (h + 1) * D].reshape(B, S, D)
            vh = qkv[:, 2 * H + h * D:2 * H + (h + 1) * D].reshape(B, S, D)
            s = jnp.einsum('bqd,bkd->bqk', qh, kh,
                           preferred_element_type=jnp.float32) * scale + bias
            s = s - jnp.max(s, axis=-1, keepdims=True)
            p = jnp.exp(s)
            p = p * pl.reciprocal(jnp.sum(p, axis=-1, keepdims=True), approx=True)
            ctx = jnp.einsum('bqk,bkd->bqd', p, vh,
                             preferred_element_type=jnp.float32).reshape(BS, D)
            # ctx @ W_O  ==  sum_h ctx_h @ W_O[h*D:(h+1)*D, :]  (no concat needed)
            attn = attn + jnp.dot(ctx, wo_l[h * D:(h + 1) * D, :],
                                  preferred_element_type=jnp.float32)
        attn = attn + bo_ref[l]
        x = _layernorm(x + attn, ln1g_ref[l], ln1b_ref[l])

        ff = _gelu(jnp.dot(x, w1_ref[l],
                           preferred_element_type=jnp.float32) + b1_ref[l])
        ff = jnp.dot(ff, w2_ref[l],
                     preferred_element_type=jnp.float32) + b2_ref[l]
        x = _layernorm(x + ff, ln2g_ref[l], ln2b_ref[l])

    # ---- pooler + fused (topic ++ sentiment) heads --------------------------
    cls = x.reshape(B, S, H)[:, 0, :]                              # (B, H) [CLS]
    pooled = jnp.tanh(jnp.dot(cls, pw_ref[...],
                              preferred_element_type=jnp.float32) + pb_ref[...])
    # nn.Dropout(0.1) -> identity in eval mode.
    out_ref[...] = jnp.dot(pooled, hw_ref[...],
                           preferred_element_type=jnp.float32) + hb_ref[...]


# ------------------------------ pallas wrapper --------------------------------
def bert_fused_logits(params, input_ids, attention_mask, token_type_ids):
    B, S = input_ids.shape
    ids2 = input_ids.reshape(B * S, 1).astype(jnp.int32)
    tt2 = token_type_ids.reshape(B * S, 1).astype(jnp.int32)
    mask = attention_mask.astype(jnp.float32)

    args = (ids2, tt2, mask,
            params['word_emb'], params['pos_emb'], params['type_emb'],
            params['emb_ln_g'], params['emb_ln_b'],
            params['wqkv'], params['bqkv'], params['wo'], params['bo'],
            params['ln1_g'], params['ln1_b'],
            params['w1'], params['b1'], params['w2'], params['b2'],
            params['ln2_g'], params['ln2_b'],
            params['pooler_w'], params['pooler_b'],
            params['head_w'], params['head_b'])

    logits = pl.pallas_call(
        bert_forward_kernel,
        out_shape=jax.ShapeDtypeStruct((B, NUM_TOPICS + NUM_SENT), jnp.float32),
        in_specs=[VMEM_SPEC] * len(args),
        out_specs=VMEM_SPEC,
    )(*args)

    topic_logits = logits[:, :NUM_TOPICS]
    sentiment_logits = logits[:, NUM_TOPICS:]
    return topic_logits, sentiment_logits


# ------------------------------ parameters ------------------------------------
def init_params(key):
    keys = iter(jax.random.split(key, 16))

    def nrm(shape):
        return jax.random.normal(next(keys), shape, jnp.float32) * 0.02

    def zeros(shape):
        return jnp.zeros(shape, jnp.float32)

    def ones(shape):
        return jnp.ones(shape, jnp.float32)

    L = NUM_LAYERS
    params = {
        'word_emb': nrm((VOCAB, HIDDEN)),
        'pos_emb': nrm((MAX_POS, HIDDEN)),
        'type_emb': nrm((2, HIDDEN)),
        'emb_ln_g': ones((1, HIDDEN)),
        'emb_ln_b': zeros((1, HIDDEN)),
        # stacked per-layer weights: one VMEM-resident array per parameter kind
        'wqkv': nrm((L, HIDDEN, 3 * HIDDEN)),
        'bqkv': zeros((L, 1, 3 * HIDDEN)),
        'wo': nrm((L, HIDDEN, HIDDEN)),
        'bo': zeros((L, 1, HIDDEN)),
        'ln1_g': ones((L, 1, HIDDEN)),
        'ln1_b': zeros((L, 1, HIDDEN)),
        'w1': nrm((L, HIDDEN, INTER)),
        'b1': zeros((L, 1, INTER)),
        'w2': nrm((L, INTER, HIDDEN)),
        'b2': zeros((L, 1, HIDDEN)),
        'ln2_g': ones((L, 1, HIDDEN)),
        'ln2_b': zeros((L, 1, HIDDEN)),
        # pooler + merged classification heads (topic ++ sentiment)
        'pooler_w': nrm((HIDDEN, HIDDEN)),
        'pooler_b': zeros((1, HIDDEN)),
        'head_w': nrm((HIDDEN, NUM_TOPICS + NUM_SENT)),
        'head_b': zeros((1, NUM_TOPICS + NUM_SENT)),
    }
    return params


# ------------------------------ forward pass -----------------------------------
def multitask_bert_forward(params, input_ids, attention_mask,
                           token_type_ids=None, topic_labels=None,
                           sentiment_label=None):
    if token_type_ids is None:
        token_type_ids = jnp.zeros_like(input_ids)

    topic_logits, sentiment_logits = bert_fused_logits(
        params, input_ids, attention_mask, token_type_ids)

    loss = None
    if topic_labels is not None and sentiment_label is not None:
        # BCEWithLogitsLoss (mean over all elements), numerically stable.
        tl = topic_logits
        bce = jnp.mean(jnp.maximum(tl, 0.0) - tl * topic_labels
                       + jnp.log1p(jnp.exp(-jnp.abs(tl))))
        # CrossEntropyLoss (mean over batch).
        logz = jax.nn.logsumexp(sentiment_logits, axis=-1)
        picked = jnp.take_along_axis(sentiment_logits,
                                     sentiment_label[:, None], axis=-1)[:, 0]
        ce = jnp.mean(logz - picked)
        loss = bce + ce

    return loss, topic_logits, sentiment_logits


# ----------------------------------- main ---------------------------------------
if __name__ == "__main__":
    key = jax.random.PRNGKey(0)
    pkey, dkey = jax.random.split(key)
    params = init_params(pkey)

    k1, k2, k3 = jax.random.split(dkey, 3)
    input_ids = jax.random.randint(k1, (BATCH, SEQ), 0, VOCAB)
    attention_mask = jnp.ones((BATCH, SEQ), jnp.float32).at[1, SEQ - 2:].set(0.0)
    token_type_ids = jnp.zeros((BATCH, SEQ), jnp.int32)
    topic_labels = jax.random.bernoulli(k2, 0.3, (BATCH, NUM_TOPICS)).astype(jnp.float32)
    sentiment_label = jax.random.randint(k3, (BATCH,), 0, NUM_SENT)

    loss, topic_logits, sentiment_logits = multitask_bert_forward(
        params, input_ids, attention_mask, token_type_ids,
        topic_labels, sentiment_label)

    jax.block_until_ready((loss, topic_logits, sentiment_logits))
    assert topic_logits.shape == (BATCH, NUM_TOPICS)
    assert sentiment_logits.shape == (BATCH, NUM_SENT)
    assert loss.shape == ()
    print("KERNEL_OK")
</pallas_src>

<mosaic_0001>
module attributes {stable_mosaic.version = 11 : i64} {
  func.func @bert_forward_kernel(%arg0: memref<16x1xi32, #tpu.memory_space<vmem>>, %arg1: memref<16x1xi32, #tpu.memory_space<vmem>>, %arg2: memref<2x8xf32, #tpu.memory_space<vmem>>, %arg3: memref<100x32xf32, #tpu.memory_space<vmem>>, %arg4: memref<16x32xf32, #tpu.memory_space<vmem>>, %arg5: memref<2x32xf32, #tpu.memory_space<vmem>>, %arg6: memref<1x32xf32, #tpu.memory_space<vmem>>, %arg7: memref<1x32xf32, #tpu.memory_space<vmem>>, %arg8: memref<2x32x96xf32, #tpu.memory_space<vmem>>, %arg9: memref<2x1x96xf32, #tpu.memory_space<vmem>>, %arg10: memref<2x32x32xf32, #tpu.memory_space<vmem>>, %arg11: memref<2x1x32xf32, #tpu.memory_space<vmem>>, %arg12: memref<2x1x32xf32, #tpu.memory_space<vmem>>, %arg13: memref<2x1x32xf32, #tpu.memory_space<vmem>>, %arg14: memref<2x32x64xf32, #tpu.memory_space<vmem>>, %arg15: memref<2x1x64xf32, #tpu.memory_space<vmem>>, %arg16: memref<2x64x32xf32, #tpu.memory_space<vmem>>, %arg17: memref<2x1x32xf32, #tpu.memory_space<vmem>>, %arg18: memref<2x1x32xf32, #tpu.memory_space<vmem>>, %arg19: memref<2x1x32xf32, #tpu.memory_space<vmem>>, %arg20: memref<32x32xf32, #tpu.memory_space<vmem>>, %arg21: memref<1x32xf32, #tpu.memory_space<vmem>>, %arg22: memref<32x13xf32, #tpu.memory_space<vmem>>, %arg23: memref<1x13xf32, #tpu.memory_space<vmem>>, %arg24: memref<2x13xf32, #tpu.memory_space<vmem>>) attributes {dimension_semantics = [], scalar_prefetch = 0 : i64, scratch_operands = 0 : i64, tpu.core_type = #tpu.core_type<tc>} {
    %c0 = arith.constant 0 : index
    %c0_0 = arith.constant 0 : index
    %0 = vector.load %arg0[%c0, %c0_0] : memref<16x1xi32, #tpu.memory_space<vmem>>, vector<16x1xi32>
    %1 = tpu.iota {dimensions = array<i32: 1>} : vector<16x100xi32>
    %2 = vector.broadcast %0 : vector<16x1xi32> to vector<16x100xi32>
    %3 = arith.cmpi eq, %2, %1 : vector<16x100xi32>
    %4 = arith.extui %3 : vector<16x100xi1> to vector<16x100xi32>
    %5 = arith.sitofp %4 : vector<16x100xi32> to vector<16x100xf32>
    %c0_1 = arith.constant 0 : index
    %c0_2 = arith.constant 0 : index
    %6 = vector.load %arg3[%c0_1, %c0_2] : memref<100x32xf32, #tpu.memory_space<vmem>>, vector<100x32xf32>
    %cst = arith.constant dense<0.000000e+00> : vector<16x32xf32>
    %7 = tpu.matmul %5, %6, %cst {dimension_numbers = #tpu.dot_dimension_numbers<[1], [0], [0], [1], [0, 0, 1, 1], [], []>} : vector<16x100xf32>, vector<100x32xf32>, vector<16x32xf32> -> vector<16x32xf32>
    %c0_3 = arith.constant 0 : index
    %c0_4 = arith.constant 0 : index
    %8 = vector.load %arg4[%c0_3, %c0_4] : memref<16x32xf32, #tpu.memory_space<vmem>>, vector<8x32xf32>
    %9 = vector.shape_cast %8 : vector<8x32xf32> to vector<1x8x32xf32>
    %10 = vector.shape_cast %9 : vector<1x8x32xf32> to vector<1x8x32xf32>
    %11 = vector.broadcast %10 : vector<1x8x32xf32> to vector<2x8x32xf32>
    %12 = vector.shape_cast %11 : vector<2x8x32xf32> to vector<16x32xf32>
    %c0_5 = arith.constant 0 : index
    %c0_6 = arith.constant 0 : index
    %13 = vector.load %arg1[%c0_5, %c0_6] : memref<16x1xi32, #tpu.memory_space<vmem>>, vector<16x1xi32>
    %c0_i32 = arith.constant 0 : i32
    %14 = vector.broadcast %c0_i32 : i32 to vector<16x1xi32>
    %15 = arith.cmpi eq, %13, %14 : vector<16x1xi32>
    %c0_7 = arith.constant 0 : index
    %c0_8 = arith.constant 0 : index
    %16 = vector.load %arg5[%c0_7, %c0_8] : memref<2x32xf32, #tpu.memory_space<vmem>>, vector<1x32xf32>
    %c1 = arith.constant 1 : index
    %c0_9 = arith.constant 0 : index
    %17 = vector.load %arg5[%c1, %c0_9] : memref<2x32xf32, #tpu.memory_space<vmem>>, vector<1x32xf32>
    %18 = vector.shape_cast %15 : vector<16x1xi1> to vector<16x1xi1>
    %19 = vector.broadcast %18 : vector<16x1xi1> to vector<16x32xi1>
    %20 = vector.shape_cast %16 : vector<1x32xf32> to vector<1x32xf32>
    %21 = vector.broadcast %20 : vector<1x32xf32> to vector<16x32xf32>
    %22 = vector.shape_cast %17 : vector<1x32xf32> to vector<1x32xf32>
    %23 = vector.broadcast %22 : vector<1x32xf32> to vector<16x32xf32>
    %24 = arith.select %19, %21, %23 : vector<16x32xi1>, vector<16x32xf32>
    %25 = arith.addf %7, %12 : vector<16x32xf32>
    %26 = arith.addf %25, %24 : vector<16x32xf32>
    %c0_10 = arith.constant 0 : index
    %c0_11 = arith.constant 0 : index
    %27 = vector.load %arg6[%c0_10, %c0_11] : memref<1x32xf32, #tpu.memory_space<vmem>>, vector<1x32xf32>
    %c0_12 = arith.constant 0 : index
    %c0_13 = arith.constant 0 : index
    %28 = vector.load %arg7[%c0_12, %c0_13] : memref<1x32xf32, #tpu.memory_space<vmem>>, vector<1x32xf32>
    %cst_14 = arith.constant dense<0.000000e+00> : vector<16xf32>
    %29 = vector.multi_reduction <add>, %26, %cst_14 [1] : vector<16x32xf32> to vector<16xf32>
    %30 = vector.shape_cast %29 : vector<16xf32> to vector<16x1xf32>
    %cst_15 = arith.constant 3.200000e+01 : f32
    %31 = vector.broadcast %cst_15 : f32 to vector<16x1xf32>
    %32 = arith.divf %30, %31 : vector<16x1xf32>
    %33 = vector.broadcast %32 : vector<16x1xf32> to vector<16x32xf32>
    %34 = arith.subf %26, %33 : vector<16x32xf32>
    %35 = arith.mulf %34, %34 : vector<16x32xf32>
    %cst_16 = arith.constant dense<0.000000e+00> : vector<16xf32>
    %36 = vector.multi_reduction <add>, %35, %cst_16 [1] : vector<16x32xf32> to vector<16xf32>
    %37 = vector.shape_cast %36 : vector<16xf32> to vector<16x1xf32>
    %cst_17 = arith.constant 3.200000e+01 : f32
    %38 = vector.broadcast %cst_17 : f32 to vector<16x1xf32>
    %39 = arith.divf %37, %38 : vector<16x1xf32>
    %40 = vector.broadcast %32 : vector<16x1xf32> to vector<16x32xf32>
    %41 = arith.subf %26, %40 : vector<16x32xf32>
    %cst_18 = arith.constant 9.99999996E-13 : f32
    %42 = vector.broadcast %cst_18 : f32 to vector<16x1xf32>
    %43 = arith.addf %39, %42 : vector<16x1xf32>
    %44 = math.rsqrt %43 : vector<16x1xf32>
    %45 = vector.broadcast %44 : vector<16x1xf32> to vector<16x32xf32>
    %46 = arith.mulf %41, %45 : vector<16x32xf32>
    %47 = vector.broadcast %27 : vector<1x32xf32> to vector<16x32xf32>
    %48 = arith.mulf %46, %47 : vector<16x32xf32>
    %49 = vector.broadcast %28 : vector<1x32xf32> to vector<16x32xf32>
    %50 = arith.addf %48, %49 : vector<16x32xf32>
    %c0_19 = arith.constant 0 : index
    %c0_20 = arith.constant 0 : index
    %51 = vector.load %arg2[%c0_19, %c0_20] : memref<2x8xf32, #tpu.memory_space<vmem>>, vector<2x8xf32>
    %cst_21 = arith.constant 1.000000e+00 : f32
    %52 = vector.broadcast %cst_21 : f32 to vector<2x8xf32>
    %53 = arith.subf %52, %51 : vector<2x8xf32>
    %cst_22 = arith.constant -1.000000e+04 : f32
    %54 = vector.broadcast %cst_22 : f32 to vector<2x8xf32>
    %55 = arith.mulf %53, %54 : vector<2x8xf32>
    %56 = vector.shape_cast %55 : vector<2x8xf32> to vector<2x1x8xf32>
    %c0_23 = arith.constant 0 : index
    %c0_24 = arith.constant 0 : index
    %c0_25 = arith.constant 0 : index
    %57 = vector.load %arg8[%c0_23, %c0_24, %c0_25] : memref<2x32x96xf32, #tpu.memory_space<vmem>>, vector<1x32x96xf32>
    %58 = vector.shape_cast %57 : vector<1x32x96xf32> to vector<32x96xf32>
    %cst_26 = arith.constant dense<0.000000e+00> : vector<16x96xf32>
    %59 = tpu.matmul %50, %58, %cst_26 {dimension_numbers = #tpu.dot_dimension_numbers<[1], [0], [0], [1], [0, 0, 1, 1], [], []>} : vector<16x32xf32>, vector<32x96xf32>, vector<16x96xf32> -> vector<16x96xf32>
    %c0_27 = arith.constant 0 : index
    %c0_28 = arith.constant 0 : index
    %c0_29 = arith.constant 0 : index
    %60 = vector.load %arg9[%c0_27, %c0_28, %c0_29] : memref<2x1x96xf32, #tpu.memory_space<vmem>>, vector<1x1x96xf32>
    %61 = vector.shape_cast %60 : vector<1x1x96xf32> to vector<1x96xf32>
    %62 = vector.broadcast %61 : vector<1x96xf32> to vector<16x96xf32>
    %63 = arith.addf %59, %62 : vector<16x96xf32>
    %c0_30 = arith.constant 0 : index
    %c0_31 = arith.constant 0 : index
    %c0_32 = arith.constant 0 : index
    %64 = vector.load %arg10[%c0_30, %c0_31, %c0_32] : memref<2x32x32xf32, #tpu.memory_space<vmem>>, vector<1x32x32xf32>
    %65 = vector.shape_cast %64 : vector<1x32x32xf32> to vector<32x32xf32>
    %cst_33 = arith.constant 0.000000e+00 : f32
    %66 = vector.broadcast %cst_33 : f32 to vector<16x32xf32>
    %67 = vector.extract_strided_slice %63 {offsets = [0, 0], sizes = [16, 16], strides = [1, 1]} : vector<16x96xf32> to vector<16x16xf32>
    %68 = vector.shape_cast %67 : vector<16x16xf32> to vector<2x8x16xf32>
    %69 = vector.extract_strided_slice %63 {offsets = [0, 32], sizes = [16, 16], strides = [1, 1]} : vector<16x96xf32> to vector<16x16xf32>
    %70 = vector.shape_cast %69 : vector<16x16xf32> to vector<2x8x16xf32>
    %71 = vector.extract_strided_slice %63 {offsets = [0, 64], sizes = [16, 16], strides = [1, 1]} : vector<16x96xf32> to vector<16x16xf32>
    %72 = vector.shape_cast %71 : vector<16x16xf32> to vector<2x8x16xf32>
    "tpu.trace_start"() <{level = 10 : i32, message = "bqd,bkd->bqk"}> : () -> ()
    %cst_34 = arith.constant dense<0.000000e+00> : vector<2x8x8xf32>
    %73 = tpu.matmul %68, %70, %cst_34 {dimension_numbers = #tpu.dot_dimension_numbers<[2], [2], [1], [1], [0, 0, 0, 1, 1, 1], [0], [0]>} : vector<2x8x16xf32>, vector<2x8x16xf32>, vector<2x8x8xf32> -> vector<2x8x8xf32>
    "tpu.trace_stop"() : () -> ()
    %cst_35 = arith.constant 2.500000e-01 : f32
    %74 = vector.broadcast %cst_35 : f32 to vector<2x8x8xf32>
    %75 = arith.mulf %73, %74 : vector<2x8x8xf32>
    %76 = vector.broadcast %56 : vector<2x1x8xf32> to vector<2x8x8xf32>
    %77 = arith.addf %75, %76 : vector<2x8x8xf32>
    %cst_36 = arith.constant dense<0xFF800000> : vector<2x8xf32>
    %78 = vector.multi_reduction <maximumf>, %77, %cst_36 [2] : vector<2x8x8xf32> to vector<2x8xf32>
    %79 = vector.shape_cast %78 : vector<2x8xf32> to vector<2x8x1xf32>
    %80 = vector.broadcast %79 : vector<2x8x1xf32> to vector<2x8x8xf32>
    %81 = arith.subf %77, %80 : vector<2x8x8xf32>
    %82 = math.exp %81 : vector<2x8x8xf32>
    %cst_37 = arith.constant dense<0.000000e+00> : vector<2x8xf32>
    %83 = vector.multi_reduction <add>, %82, %cst_37 [2] : vector<2x8x8xf32> to vector<2x8xf32>
    %84 = vector.shape_cast %83 : vector<2x8xf32> to vector<2x8x1xf32>
    %85 = tpu.reciprocal %84 {approx = true} : vector<2x8x1xf32> -> vector<2x8x1xf32>
    %86 = vector.broadcast %85 : vector<2x8x1xf32> to vector<2x8x8xf32>
    %87 = arith.mulf %82, %86 : vector<2x8x8xf32>
    "tpu.trace_start"() <{level = 10 : i32, message = "bqk,bkd->bqd"}> : () -> ()
    %cst_38 = arith.constant dense<0.000000e+00> : vector<2x8x16xf32>
    %88 = tpu.matmul %87, %72, %cst_38 {dimension_numbers = #tpu.dot_dimension_numbers<[2], [1], [1], [2], [0, 0, 0, 1, 1, 2], [0], [0]>} : vector<2x8x8xf32>, vector<2x8x16xf32>, vector<2x8x16xf32> -> vector<2x8x16xf32>
    "tpu.trace_stop"() : () -> ()
    %89 = vector.shape_cast %88 : vector<2x8x16xf32> to vector<16x16xf32>
    %90 = vector.extract_strided_slice %65 {offsets = [0, 0], sizes = [16, 32], strides = [1, 1]} : vector<32x32xf32> to vector<16x32xf32>
    %cst_39 = arith.constant dense<0.000000e+00> : vector<16x32xf32>
    %91 = tpu.matmul %89, %90, %cst_39 {dimension_numbers = #tpu.dot_dimension_numbers<[1], [0], [0], [1], [0, 0, 1, 1], [], []>} : vector<16x16xf32>, vector<16x32xf32>, vector<16x32xf32> -> vector<16x32xf32>
    %92 = arith.addf %66, %91 : vector<16x32xf32>
    %93 = vector.extract_strided_slice %63 {offsets = [0, 16], sizes = [16, 16], strides = [1, 1]} : vector<16x96xf32> to vector<16x16xf32>
    %94 = vector.shape_cast %93 : vector<16x16xf32> to vector<2x8x16xf32>
    %95 = vector.extract_strided_slice %63 {offsets = [0, 48], sizes = [16, 16], strides = [1, 1]} : vector<16x96xf32> to vector<16x16xf32>
    %96 = vector.shape_cast %95 : vector<16x16xf32> to vector<2x8x16xf32>
    %97 = vector.extract_strided_slice %63 {offsets = [0, 80], sizes = [16, 16], strides = [1, 1]} : vector<16x96xf32> to vector<16x16xf32>
    %98 = vector.shape_cast %97 : vector<16x16xf32> to vector<2x8x16xf32>
    "tpu.trace_start"() <{level = 10 : i32, message = "bqd,bkd->bqk"}> : () -> ()
    %cst_40 = arith.constant dense<0.000000e+00> : vector<2x8x8xf32>
    %99 = tpu.matmul %94, %96, %cst_40 {dimension_numbers = #tpu.dot_dimension_numbers<[2], [2], [1], [1], [0, 0, 0, 1, 1, 1], [0], [0]>} : vector<2x8x16xf32>, vector<2x8x16xf32>, vector<2x8x8xf32> -> vector<2x8x8xf32>
    "tpu.trace_stop"() : () -> ()
    %cst_41 = arith.constant 2.500000e-01 : f32
    %100 = vector.broadcast %cst_41 : f32 to vector<2x8x8xf32>
    %101 = arith.mulf %99, %100 : vector<2x8x8xf32>
    %102 = vector.broadcast %56 : vector<2x1x8xf32> to vector<2x8x8xf32>
    %103 = arith.addf %101, %102 : vector<2x8x8xf32>
    %cst_42 = arith.constant dense<0xFF800000> : vector<2x8xf32>
    %104 = vector.multi_reduction <maximumf>, %103, %cst_42 [2] : vector<2x8x8xf32> to vector<2x8xf32>
    %105 = vector.shape_cast %104 : vector<2x8xf32> to vector<2x8x1xf32>
    %106 = vector.broadcast %105 : vector<2x8x1xf32> to vector<2x8x8xf32>
    %107 = arith.subf %103, %106 : vector<2x8x8xf32>
    %108 = math.exp %107 : vector<2x8x8xf32>
    %cst_43 = arith.constant dense<0.000000e+00> : vector<2x8xf32>
    %109 = vector.multi_reduction <add>, %108, %cst_43 [2] : vector<2x8x8xf32> to vector<2x8xf32>
    %110 = vector.shape_cast %109 : vector<2x8xf32> to vector<2x8x1xf32>
    %111 = tpu.reciprocal %110 {approx = true} : vector<2x8x1xf32> -> vector<2x8x1xf32>
    %112 = vector.broadcast %111 : vector<2x8x1xf32> to vector<2x8x8xf32>
    %113 = arith.mulf %108, %112 : vector<2x8x8xf32>
    "tpu.trace_start"() <{level = 10 : i32, message = "bqk,bkd->bqd"}> : () -> ()
    %cst_44 = arith.constant dense<0.000000e+00> : vector<2x8x16xf32>
    %114 = tpu.matmul %113, %98, %cst_44 {dimension_numbers = #tpu.dot_dimension_numbers<[2], [1], [1], [2], [0, 0, 0, 1, 1, 2], [0], [0]>} : vector<2x8x8xf32>, vector<2x8x16xf32>, vector<2x8x16xf32> -> vector<2x8x16xf32>
    "tpu.trace_stop"() : () -> ()
    %115 = vector.shape_cast %114 : vector<2x8x16xf32> to vector<16x16xf32>
    %116 = vector.extract_strided_slice %65 {offsets = [16, 0], sizes = [16, 32], strides = [1, 1]} : vector<32x32xf32> to vector<16x32xf32>
    %cst_45 = arith.constant dense<0.000000e+00> : vector<16x32xf32>
    %117 = tpu.matmul %115, %116, %cst_45 {dimension_numbers = #tpu.dot_dimension_numbers<[1], [0], [0], [1], [0, 0, 1, 1], [], []>} : vector<16x16xf32>, vector<16x32xf32>, vector<16x32xf32> -> vector<16x32xf32>
    %118 = arith.addf %92, %117 : vector<16x32xf32>
    %c0_46 = arith.constant 0 : index
    %c0_47 = arith.constant 0 : index
    %c0_48 = arith.constant 0 : index
    %119 = vector.load %arg11[%c0_46, %c0_47, %c0_48] : memref<2x1x32xf32, #tpu.memory_space<vmem>>, vector<1x1x32xf32>
    %120 = vector.shape_cast %119 : vector<1x1x32xf32> to vector<1x32xf32>
    %121 = vector.broadcast %120 : vector<1x32xf32> to vector<16x32xf32>
    %122 = arith.addf %118, %121 : vector<16x32xf32>
    %123 = arith.addf %50, %122 : vector<16x32xf32>
    %c0_49 = arith.constant 0 : index
    %c0_50 = arith.constant 0 : index
    %c0_51 = arith.constant 0 : index
    %124 = vector.load %arg12[%c0_49, %c0_50, %c0_51] : memref<2x1x32xf32, #tpu.memory_space<vmem>>, vector<1x1x32xf32>
    %125 = vector.shape_cast %124 : vector<1x1x32xf32> to vector<1x32xf32>
    %c0_52 = arith.constant 0 : index
    %c0_53 = arith.constant 0 : index
    %c0_54 = arith.constant 0 : index
    %126 = vector.load %arg13[%c0_52, %c0_53, %c0_54] : memref<2x1x32xf32, #tpu.memory_space<vmem>>, vector<1x1x32xf32>
    %127 = vector.shape_cast %126 : vector<1x1x32xf32> to vector<1x32xf32>
    %cst_55 = arith.constant dense<0.000000e+00> : vector<16xf32>
    %128 = vector.multi_reduction <add>, %123, %cst_55 [1] : vector<16x32xf32> to vector<16xf32>
    %129 = vector.shape_cast %128 : vector<16xf32> to vector<16x1xf32>
    %cst_56 = arith.constant 3.200000e+01 : f32
    %130 = vector.broadcast %cst_56 : f32 to vector<16x1xf32>
    %131 = arith.divf %129, %130 : vector<16x1xf32>
    %132 = vector.broadcast %131 : vector<16x1xf32> to vector<16x32xf32>
    %133 = arith.subf %123, %132 : vector<16x32xf32>
    %134 = arith.mulf %133, %133 : vector<16x32xf32>
    %cst_57 = arith.constant dense<0.000000e+00> : vector<16xf32>
    %135 = vector.multi_reduction <add>, %134, %cst_57 [1] : vector<16x32xf32> to vector<16xf32>
    %136 = vector.shape_cast %135 : vector<16xf32> to vector<16x1xf32>
    %cst_58 = arith.constant 3.200000e+01 : f32
    %137 = vector.broadcast %cst_58 : f32 to vector<16x1xf32>
    %138 = arith.divf %136, %137 : vector<16x1xf32>
    %139 = vector.broadcast %131 : vector<16x1xf32> to vector<16x32xf32>
    %140 = arith.subf %123, %139 : vector<16x32xf32>
    %cst_59 = arith.constant 9.99999996E-13 : f32
    %141 = vector.broadcast %cst_59 : f32 to vector<16x1xf32>
    %142 = arith.addf %138, %141 : vector<16x1xf32>
    %143 = math.rsqrt %142 : vector<16x1xf32>
    %144 = vector.broadcast %143 : vector<16x1xf32> to vector<16x32xf32>
    %145 = arith.mulf %140, %144 : vector<16x32xf32>
    %146 = vector.broadcast %125 : vector<1x32xf32> to vector<16x32xf32>
    %147 = arith.mulf %145, %146 : vector<16x32xf32>
    %148 = vector.broadcast %127 : vector<1x32xf32> to vector<16x32xf32>
    %149 = arith.addf %147, %148 : vector<16x32xf32>
    %c0_60 = arith.constant 0 : index
    %c0_61 = arith.constant 0 : index
    %c0_62 = arith.constant 0 : index
    %150 = vector.load %arg14[%c0_60, %c0_61, %c0_62] : memref<2x32x64xf32, #tpu.memory_space<vmem>>, vector<1x32x64xf32>
    %151 = vector.shape_cast %150 : vector<1x32x64xf32> to vector<32x64xf32>
    %cst_63 = arith.constant dense<0.000000e+00> : vector<16x64xf32>
    %152 = tpu.matmul %149, %151, %cst_63 {dimension_numbers = #tpu.dot_dimension_numbers<[1], [0], [0], [1], [0, 0, 1, 1], [], []>} : vector<16x32xf32>, vector<32x64xf32>, vector<16x64xf32> -> vector<16x64xf32>
    %c0_64 = arith.constant 0 : index
    %c0_65 = arith.constant 0 : index
    %c0_66 = arith.constant 0 : index
    %153 = vector.load %arg15[%c0_64, %c0_65, %c0_66] : memref<2x1x64xf32, #tpu.memory_space<vmem>>, vector<1x1x64xf32>
    %154 = vector.shape_cast %153 : vector<1x1x64xf32> to vector<1x64xf32>
    %155 = vector.broadcast %154 : vector<1x64xf32> to vector<16x64xf32>
    %156 = arith.addf %152, %155 : vector<16x64xf32>
    %cst_67 = arith.constant 5.000000e-01 : f32
    %157 = vector.broadcast %cst_67 : f32 to vector<16x64xf32>
    %158 = arith.mulf %157, %156 : vector<16x64xf32>
    %cst_68 = arith.constant 4.471500e-02 : f32
    %159 = vector.broadcast %cst_68 : f32 to vector<16x64xf32>
    %160 = arith.mulf %159, %156 : vector<16x64xf32>
    %161 = arith.mulf %160, %156 : vector<16x64xf32>
    %162 = arith.mulf %161, %156 : vector<16x64xf32>
    %163 = arith.addf %156, %162 : vector<16x64xf32>
    %cst_69 = arith.constant 0.797884583 : f32
    %164 = vector.broadcast %cst_69 : f32 to vector<16x64xf32>
    %165 = arith.mulf %164, %163 : vector<16x64xf32>
    %166 = math.tanh %165 : vector<16x64xf32>
    %cst_70 = arith.constant 1.000000e+00 : f32
    %167 = vector.broadcast %cst_70 : f32 to vector<16x64xf32>
    %168 = arith.addf %167, %166 : vector<16x64xf32>
    %169 = arith.mulf %158, %168 : vector<16x64xf32>
    %c0_71 = arith.constant 0 : index
    %c0_72 = arith.constant 0 : index
    %c0_73 = arith.constant 0 : index
    %170 = vector.load %arg16[%c0_71, %c0_72, %c0_73] : memref<2x64x32xf32, #tpu.memory_space<vmem>>, vector<1x64x32xf32>
    %171 = vector.shape_cast %170 : vector<1x64x32xf32> to vector<64x32xf32>
    %cst_74 = arith.constant dense<0.000000e+00> : vector<16x32xf32>
    %172 = tpu.matmul %169, %171, %cst_74 {dimension_numbers = #tpu.dot_dimension_numbers<[1], [0], [0], [1], [0, 0, 1, 1], [], []>} : vector<16x64xf32>, vector<64x32xf32>, vector<16x32xf32> -> vector<16x32xf32>
    %c0_75 = arith.constant 0 : index
    %c0_76 = arith.constant 0 : index
    %c0_77 = arith.constant 0 : index
    %173 = vector.load %arg17[%c0_75, %c0_76, %c0_77] : memref<2x1x32xf32, #tpu.memory_space<vmem>>, vector<1x1x32xf32>
    %174 = vector.shape_cast %173 : vector<1x1x32xf32> to vector<1x32xf32>
    %175 = vector.broadcast %174 : vector<1x32xf32> to vector<16x32xf32>
    %176 = arith.addf %172, %175 : vector<16x32xf32>
    %177 = arith.addf %149, %176 : vector<16x32xf32>
    %c0_78 = arith.constant 0 : index
    %c0_79 = arith.constant 0 : index
    %c0_80 = arith.constant 0 : index
    %178 = vector.load %arg18[%c0_78, %c0_79, %c0_80] : memref<2x1x32xf32, #tpu.memory_space<vmem>>, vector<1x1x32xf32>
    %179 = vector.shape_cast %178 : vector<1x1x32xf32> to vector<1x32xf32>
    %c0_81 = arith.constant 0 : index
    %c0_82 = arith.constant 0 : index
    %c0_83 = arith.constant 0 : index
    %180 = vector.load %arg19[%c0_81, %c0_82, %c0_83] : memref<2x1x32xf32, #tpu.memory_space<vmem>>, vector<1x1x32xf32>
    %181 = vector.shape_cast %180 : vector<1x1x32xf32> to vector<1x32xf32>
    %cst_84 = arith.constant dense<0.000000e+00> : vector<16xf32>
    %182 = vector.multi_reduction <add>, %177, %cst_84 [1] : vector<16x32xf32> to vector<16xf32>
    %183 = vector.shape_cast %182 : vector<16xf32> to vector<16x1xf32>
    %cst_85 = arith.constant 3.200000e+01 : f32
    %184 = vector.broadcast %cst_85 : f32 to vector<16x1xf32>
    %185 = arith.divf %183, %184 : vector<16x1xf32>
    %186 = vector.broadcast %185 : vector<16x1xf32> to vector<16x32xf32>
    %187 = arith.subf %177, %186 : vector<16x32xf32>
    %188 = arith.mulf %187, %187 : vector<16x32xf32>
    %cst_86 = arith.constant dense<0.000000e+00> : vector<16xf32>
    %189 = vector.multi_reduction <add>, %188, %cst_86 [1] : vector<16x32xf32> to vector<16xf32>
    %190 = vector.shape_cast %189 : vector<16xf32> to vector<16x1xf32>
    %cst_87 = arith.constant 3.200000e+01 : f32
    %191 = vector.broadcast %cst_87 : f32 to vector<16x1xf32>
    %192 = arith.divf %190, %191 : vector<16x1xf32>
    %193 = vector.broadcast %185 : vector<16x1xf32> to vector<16x32xf32>
    %194 = arith.subf %177, %193 : vector<16x32xf32>
    %cst_88 = arith.constant 9.99999996E-13 : f32
    %195 = vector.broadcast %cst_88 : f32 to vector<16x1xf32>
    %196 = arith.addf %192, %195 : vector<16x1xf32>
    %197 = math.rsqrt %196 : vector<16x1xf32>
    %198 = vector.broadcast %197 : vector<16x1xf32> to vector<16x32xf32>
    %199 = arith.mulf %194, %198 : vector<16x32xf32>
    %200 = vector.broadcast %179 : vector<1x32xf32> to vector<16x32xf32>
    %201 = arith.mulf %199, %200 : vector<16x32xf32>
    %202 = vector.broadcast %181 : vector<1x32xf32> to vector<16x32xf32>
    %203 = arith.addf %201, %202 : vector<16x32xf32>
    %c1_89 = arith.constant 1 : index
    %c0_90 = arith.constant 0 : index
    %c0_91 = arith.constant 0 : index
    %204 = vector.load %arg8[%c1_89, %c0_90, %c0_91] : memref<2x32x96xf32, #tpu.memory_space<vmem>>, vector<1x32x96xf32>
    %205 = vector.shape_cast %204 : vector<1x32x96xf32> to vector<32x96xf32>
    %cst_92 = arith.constant dense<0.000000e+00> : vector<16x96xf32>
    %206 = tpu.matmul %203, %205, %cst_92 {dimension_numbers = #tpu.dot_dimension_numbers<[1], [0], [0], [1], [0, 0, 1, 1], [], []>} : vector<16x32xf32>, vector<32x96xf32>, vector<16x96xf32> -> vector<16x96xf32>
    %c1_93 = arith.constant 1 : index
    %c0_94 = arith.constant 0 : index
    %c0_95 = arith.constant 0 : index
    %207 = vector.load %arg9[%c1_93, %c0_94, %c0_95] : memref<2x1x96xf32, #tpu.memory_space<vmem>>, vector<1x1x96xf32>
    %208 = vector.shape_cast %207 : vector<1x1x96xf32> to vector<1x96xf32>
    %209 = vector.broadcast %208 : vector<1x96xf32> to vector<16x96xf32>
    %210 = arith.addf %206, %209 : vector<16x96xf32>
    %c1_96 = arith.constant 1 : index
    %c0_97 = arith.constant 0 : index
    %c0_98 = arith.constant 0 : index
    %211 = vector.load %arg10[%c1_96, %c0_97, %c0_98] : memref<2x32x32xf32, #tpu.memory_space<vmem>>, vector<1x32x32xf32>
    %212 = vector.shape_cast %211 : vector<1x32x32xf32> to vector<32x32xf32>
    %cst_99 = arith.constant 0.000000e+00 : f32
    %213 = vector.broadcast %cst_99 : f32 to vector<16x32xf32>
    %214 = vector.extract_strided_slice %210 {offsets = [0, 0], sizes = [16, 16], strides = [1, 1]} : vector<16x96xf32> to vector<16x16xf32>
    %215 = vector.shape_cast %214 : vector<16x16xf32> to vector<2x8x16xf32>
    %216 = vector.extract_strided_slice %210 {offsets = [0, 32], sizes = [16, 16], strides = [1, 1]} : vector<16x96xf32> to vector<16x16xf32>
    %217 = vector.shape_cast %216 : vector<16x16xf32> to vector<2x8x16xf32>
    %218 = vector.extract_strided_slice %210 {offsets = [0, 64], sizes = [16, 16], strides = [1, 1]} : vector<16x96xf32> to vector<16x16xf32>
    %219 = vector.shape_cast %218 : vector<16x16xf32> to vector<2x8x16xf32>
    "tpu.trace_start"() <{level = 10 : i32, message = "bqd,bkd->bqk"}> : () -> ()
    %cst_100 = arith.constant dense<0.000000e+00> : vector<2x8x8xf32>
    %220 = tpu.matmul %215, %217, %cst_100 {dimension_numbers = #tpu.dot_dimension_numbers<[2], [2], [1], [1], [0, 0, 0, 1, 1, 1], [0], [0]>} : vector<2x8x16xf32>, vector<2x8x16xf32>, vector<2x8x8xf32> -> vector<2x8x8xf32>
    "tpu.trace_stop"() : () -> ()
    %cst_101 = arith.constant 2.500000e-01 : f32
    %221 = vector.broadcast %cst_101 : f32 to vector<2x8x8xf32>
    %222 = arith.mulf %220, %221 : vector<2x8x8xf32>
    %223 = vector.broadcast %56 : vector<2x1x8xf32> to vector<2x8x8xf32>
    %224 = arith.addf %222, %223 : vector<2x8x8xf32>
    %cst_102 = arith.constant dense<0xFF800000> : vector<2x8xf32>
    %225 = vector.multi_reduction <maximumf>, %224, %cst_102 [2] : vector<2x8x8xf32> to vector<2x8xf32>
    %226 = vector.shape_cast %225 : vector<2x8xf32> to vector<2x8x1xf32>
    %227 = vector.broadcast %226 : vector<2x8x1xf32> to vector<2x8x8xf32>
    %228 = arith.subf %224, %227 : vector<2x8x8xf32>
    %229 = math.exp %228 : vector<2x8x8xf32>
    %cst_103 = arith.constant dense<0.000000e+00> : vector<2x8xf32>
    %230 = vector.multi_reduction <add>, %229, %cst_103 [2] : vector<2x8x8xf32> to vector<2x8xf32>
    %231 = vector.shape_cast %230 : vector<2x8xf32> to vector<2x8x1xf32>
    %232 = tpu.reciprocal %231 {approx = true} : vector<2x8x1xf32> -> vector<2x8x1xf32>
    %233 = vector.broadcast %232 : vector<2x8x1xf32> to vector<2x8x8xf32>
    %234 = arith.mulf %229, %233 : vector<2x8x8xf32>
    "tpu.trace_start"() <{level = 10 : i32, message = "bqk,bkd->bqd"}> : () -> ()
    %cst_104 = arith.constant dense<0.000000e+00> : vector<2x8x16xf32>
    %235 = tpu.matmul %234, %219, %cst_104 {dimension_numbers = #tpu.dot_dimension_numbers<[2], [1], [1], [2], [0, 0, 0, 1, 1, 2], [0], [0]>} : vector<2x8x8xf32>, vector<2x8x16xf32>, vector<2x8x16xf32> -> vector<2x8x16xf32>
    "tpu.trace_stop"() : () -> ()
    %236 = vector.shape_cast %235 : vector<2x8x16xf32> to vector<16x16xf32>
    %237 = vector.extract_strided_slice %212 {offsets = [0, 0], sizes = [16, 32], strides = [1, 1]} : vector<32x32xf32> to vector<16x32xf32>
    %cst_105 = arith.constant dense<0.000000e+00> : vector<16x32xf32>
    %238 = tpu.matmul %236, %237, %cst_105 {dimension_numbers = #tpu.dot_dimension_numbers<[1], [0], [0], [1], [0, 0, 1, 1], [], []>} : vector<16x16xf32>, vector<16x32xf32>, vector<16x32xf32> -> vector<16x32xf32>
    %239 = arith.addf %213, %238 : vector<16x32xf32>
    %240 = vector.extract_strided_slice %210 {offsets = [0, 16], sizes = [16, 16], strides = [1, 1]} : vector<16x96xf32> to vector<16x16xf32>
    %241 = vector.shape_cast %240 : vector<16x16xf32> to vector<2x8x16xf32>
    %242 = vector.extract_strided_slice %210 {offsets = [0, 48], sizes = [16, 16], strides = [1, 1]} : vector<16x96xf32> to vector<16x16xf32>
    %243 = vector.shape_cast %242 : vector<16x16xf32> to vector<2x8x16xf32>
    %244 = vector.extract_strided_slice %210 {offsets = [0, 80], sizes = [16, 16], strides = [1, 1]} : vector<16x96xf32> to vector<16x16xf32>
    %245 = vector.shape_cast %244 : vector<16x16xf32> to vector<2x8x16xf32>
    "tpu.trace_start"() <{level = 10 : i32, message = "bqd,bkd->bqk"}> : () -> ()
    %cst_106 = arith.constant dense<0.000000e+00> : vector<2x8x8xf32>
    %246 = tpu.matmul %241, %243, %cst_106 {dimension_numbers = #tpu.dot_dimension_numbers<[2], [2], [1], [1], [0, 0, 0, 1, 1, 1], [0], [0]>} : vector<2x8x16xf32>, vector<2x8x16xf32>, vector<2x8x8xf32> -> vector<2x8x8xf32>
    "tpu.trace_stop"() : () -> ()
    %cst_107 = arith.constant 2.500000e-01 : f32
    %247 = vector.broadcast %cst_107 : f32 to vector<2x8x8xf32>
    %248 = arith.mulf %246, %247 : vector<2x8x8xf32>
    %249 = vector.broadcast %56 : vector<2x1x8xf32> to vector<2x8x8xf32>
    %250 = arith.addf %248, %249 : vector<2x8x8xf32>
    %cst_108 = arith.constant dense<0xFF800000> : vector<2x8xf32>
    %251 = vector.multi_reduction <maximumf>, %250, %cst_108 [2] : vector<2x8x8xf32> to vector<2x8xf32>
    %252 = vector.shape_cast %251 : vector<2x8xf32> to vector<2x8x1xf32>
    %253 = vector.broadcast %252 : vector<2x8x1xf32> to vector<2x8x8xf32>
    %254 = arith.subf %250, %253 : vector<2x8x8xf32>
    %255 = math.exp %254 : vector<2x8x8xf32>
    %cst_109 = arith.constant dense<0.000000e+00> : vector<2x8xf32>
    %256 = vector.multi_reduction <add>, %255, %cst_109 [2] : vector<2x8x8xf32> to vector<2x8xf32>
    %257 = vector.shape_cast %256 : vector<2x8xf32> to vector<2x8x1xf32>
    %258 = tpu.reciprocal %257 {approx = true} : vector<2x8x1xf32> -> vector<2x8x1xf32>
    %259 = vector.broadcast %258 : vector<2x8x1xf32> to vector<2x8x8xf32>
    %260 = arith.mulf %255, %259 : vector<2x8x8xf32>
    "tpu.trace_start"() <{level = 10 : i32, message = "bqk,bkd->bqd"}> : () -> ()
    %cst_110 = arith.constant dense<0.000000e+00> : vector<2x8x16xf32>
    %261 = tpu.matmul %260, %245, %cst_110 {dimension_numbers = #tpu.dot_dimension_numbers<[2], [1], [1], [2], [0, 0, 0, 1, 1, 2], [0], [0]>} : vector<2x8x8xf32>, vector<2x8x16xf32>, vector<2x8x16xf32> -> vector<2x8x16xf32>
    "tpu.trace_stop"() : () -> ()
    %262 = vector.shape_cast %261 : vector<2x8x16xf32> to vector<16x16xf32>
    %263 = vector.extract_strided_slice %212 {offsets = [16, 0], sizes = [16, 32], strides = [1, 1]} : vector<32x32xf32> to vector<16x32xf32>
    %cst_111 = arith.constant dense<0.000000e+00> : vector<16x32xf32>
    %264 = tpu.matmul %262, %263, %cst_111 {dimension_numbers = #tpu.dot_dimension_numbers<[1], [0], [0], [1], [0, 0, 1, 1], [], []>} : vector<16x16xf32>, vector<16x32xf32>, vector<16x32xf32> -> vector<16x32xf32>
    %265 = arith.addf %239, %264 : vector<16x32xf32>
    %c1_112 = arith.constant 1 : index
    %c0_113 = arith.constant 0 : index
    %c0_114 = arith.constant 0 : index
    %266 = vector.load %arg11[%c1_112, %c0_113, %c0_114] : memref<2x1x32xf32, #tpu.memory_space<vmem>>, vector<1x1x32xf32>
    %267 = vector.shape_cast %266 : vector<1x1x32xf32> to vector<1x32xf32>
    %268 = vector.broadcast %267 : vector<1x32xf32> to vector<16x32xf32>
    %269 = arith.addf %265, %268 : vector<16x32xf32>
    %270 = arith.addf %203, %269 : vector<16x32xf32>
    %c1_115 = arith.constant 1 : index
    %c0_116 = arith.constant 0 : index
    %c0_117 = arith.constant 0 : index
    %271 = vector.load %arg12[%c1_115, %c0_116, %c0_117] : memref<2x1x32xf32, #tpu.memory_space<vmem>>, vector<1x1x32xf32>
    %272 = vector.shape_cast %271 : vector<1x1x32xf32> to vector<1x32xf32>
    %c1_118 = arith.constant 1 : index
    %c0_119 = arith.constant 0 : index
    %c0_120 = arith.constant 0 : index
    %273 = vector.load %arg13[%c1_118, %c0_119, %c0_120] : memref<2x1x32xf32, #tpu.memory_space<vmem>>, vector<1x1x32xf32>
    %274 = vector.shape_cast %273 : vector<1x1x32xf32> to vector<1x32xf32>
    %cst_121 = arith.constant dense<0.000000e+00> : vector<16xf32>
    %275 = vector.multi_reduction <add>, %270, %cst_121 [1] : vector<16x32xf32> to vector<16xf32>
    %276 = vector.shape_cast %275 : vector<16xf32> to vector<16x1xf32>
    %cst_122 = arith.constant 3.200000e+01 : f32
    %277 = vector.broadcast %cst_122 : f32 to vector<16x1xf32>
    %278 = arith.divf %276, %277 : vector<16x1xf32>
    %279 = vector.broadcast %278 : vector<16x1xf32> to vector<16x32xf32>
    %280 = arith.subf %270, %279 : vector<16x32xf32>
    %281 = arith.mulf %280, %280 : vector<16x32xf32>
    %cst_123 = arith.constant dense<0.000000e+00> : vector<16xf32>
    %282 = vector.multi_reduction <add>, %281, %cst_123 [1] : vector<16x32xf32> to vector<16xf32>
    %283 = vector.shape_cast %282 : vector<16xf32> to vector<16x1xf32>
    %cst_124 = arith.constant 3.200000e+01 : f32
    %284 = vector.broadcast %cst_124 : f32 to vector<16x1xf32>
    %285 = arith.divf %283, %284 : vector<16x1xf32>
    %286 = vector.broadcast %278 : vector<16x1xf32> to vector<16x32xf32>
    %287 = arith.subf %270, %286 : vector<16x32xf32>
    %cst_125 = arith.constant 9.99999996E-13 : f32
    %288 = vector.broadcast %cst_125 : f32 to vector<16x1xf32>
    %289 = arith.addf %285, %288 : vector<16x1xf32>
    %290 = math.rsqrt %289 : vector<16x1xf32>
    %291 = vector.broadcast %290 : vector<16x1xf32> to vector<16x32xf32>
    %292 = arith.mulf %287, %291 : vector<16x32xf32>
    %293 = vector.broadcast %272 : vector<1x32xf32> to vector<16x32xf32>
    %294 = arith.mulf %292, %293 : vector<16x32xf32>
    %295 = vector.broadcast %274 : vector<1x32xf32> to vector<16x32xf32>
    %296 = arith.addf %294, %295 : vector<16x32xf32>
    %c1_126 = arith.constant 1 : index
    %c0_127 = arith.constant 0 : index
    %c0_128 = arith.constant 0 : index
    %297 = vector.load %arg14[%c1_126, %c0_127, %c0_128] : memref<2x32x64xf32, #tpu.memory_space<vmem>>, vector<1x32x64xf32>
    %298 = vector.shape_cast %297 : vector<1x32x64xf32> to vector<32x64xf32>
    %cst_129 = arith.constant dense<0.000000e+00> : vector<16x64xf32>
    %299 = tpu.matmul %296, %298, %cst_129 {dimension_numbers = #tpu.dot_dimension_numbers<[1], [0], [0], [1], [0, 0, 1, 1], [], []>} : vector<16x32xf32>, vector<32x64xf32>, vector<16x64xf32> -> vector<16x64xf32>
    %c1_130 = arith.constant 1 : index
    %c0_131 = arith.constant 0 : index
    %c0_132 = arith.constant 0 : index
    %300 = vector.load %arg15[%c1_130, %c0_131, %c0_132] : memref<2x1x64xf32, #tpu.memory_space<vmem>>, vector<1x1x64xf32>
    %301 = vector.shape_cast %300 : vector<1x1x64xf32> to vector<1x64xf32>
    %302 = vector.broadcast %301 : vector<1x64xf32> to vector<16x64xf32>
    %303 = arith.addf %299, %302 : vector<16x64xf32>
    %cst_133 = arith.constant 5.000000e-01 : f32
    %304 = vector.broadcast %cst_133 : f32 to vector<16x64xf32>
    %305 = arith.mulf %304, %303 : vector<16x64xf32>
    %cst_134 = arith.constant 4.471500e-02 : f32
    %306 = vector.broadcast %cst_134 : f32 to vector<16x64xf32>
    %307 = arith.mulf %306, %303 : vector<16x64xf32>
    %308 = arith.mulf %307, %303 : vector<16x64xf32>
    %309 = arith.mulf %308, %303 : vector<16x64xf32>
    %310 = arith.addf %303, %309 : vector<16x64xf32>
    %cst_135 = arith.constant 0.797884583 : f32
    %311 = vector.broadcast %cst_135 : f32 to vector<16x64xf32>
    %312 = arith.mulf %311, %310 : vector<16x64xf32>
    %313 = math.tanh %312 : vector<16x64xf32>
    %cst_136 = arith.constant 1.000000e+00 : f32
    %314 = vector.broadcast %cst_136 : f32 to vector<16x64xf32>
    %315 = arith.addf %314, %313 : vector<16x64xf32>
    %316 = arith.mulf %305, %315 : vector<16x64xf32>
    %c1_137 = arith.constant 1 : index
    %c0_138 = arith.constant 0 : index
    %c0_139 = arith.constant 0 : index
    %317 = vector.load %arg16[%c1_137, %c0_138, %c0_139] : memref<2x64x32xf32, #tpu.memory_space<vmem>>, vector<1x64x32xf32>
    %318 = vector.shape_cast %317 : vector<1x64x32xf32> to vector<64x32xf32>
    %cst_140 = arith.constant dense<0.000000e+00> : vector<16x32xf32>
    %319 = tpu.matmul %316, %318, %cst_140 {dimension_numbers = #tpu.dot_dimension_numbers<[1], [0], [0], [1], [0, 0, 1, 1], [], []>} : vector<16x64xf32>, vector<64x32xf32>, vector<16x32xf32> -> vector<16x32xf32>
    %c1_141 = arith.constant 1 : index
    %c0_142 = arith.constant 0 : index
    %c0_143 = arith.constant 0 : index
    %320 = vector.load %arg17[%c1_141, %c0_142, %c0_143] : memref<2x1x32xf32, #tpu.memory_space<vmem>>, vector<1x1x32xf32>
    %321 = vector.shape_cast %320 : vector<1x1x32xf32> to vector<1x32xf32>
    %322 = vector.broadcast %321 : vector<1x32xf32> to vector<16x32xf32>
    %323 = arith.addf %319, %322 : vector<16x32xf32>
    %324 = arith.addf %296, %323 : vector<16x32xf32>
    %c1_144 = arith.constant 1 : index
    %c0_145 = arith.constant 0 : index
    %c0_146 = arith.constant 0 : index
    %325 = vector.load %arg18[%c1_144, %c0_145, %c0_146] : memref<2x1x32xf32, #tpu.memory_space<vmem>>, vector<1x1x32xf32>
    %326 = vector.shape_cast %325 : vector<1x1x32xf32> to vector<1x32xf32>
    %c1_147 = arith.constant 1 : index
    %c0_148 = arith.constant 0 : index
    %c0_149 = arith.constant 0 : index
    %327 = vector.load %arg19[%c1_147, %c0_148, %c0_149] : memref<2x1x32xf32, #tpu.memory_space<vmem>>, vector<1x1x32xf32>
    %328 = vector.shape_cast %327 : vector<1x1x32xf32> to vector<1x32xf32>
    %cst_150 = arith.constant dense<0.000000e+00> : vector<16xf32>
    %329 = vector.multi_reduction <add>, %324, %cst_150 [1] : vector<16x32xf32> to vector<16xf32>
    %330 = vector.shape_cast %329 : vector<16xf32> to vector<16x1xf32>
    %cst_151 = arith.constant 3.200000e+01 : f32
    %331 = vector.broadcast %cst_151 : f32 to vector<16x1xf32>
    %332 = arith.divf %330, %331 : vector<16x1xf32>
    %333 = vector.broadcast %332 : vector<16x1xf32> to vector<16x32xf32>
    %334 = arith.subf %324, %333 : vector<16x32xf32>
    %335 = arith.mulf %334, %334 : vector<16x32xf32>
    %cst_152 = arith.constant dense<0.000000e+00> : vector<16xf32>
    %336 = vector.multi_reduction <add>, %335, %cst_152 [1] : vector<16x32xf32> to vector<16xf32>
    %337 = vector.shape_cast %336 : vector<16xf32> to vector<16x1xf32>
    %cst_153 = arith.constant 3.200000e+01 : f32
    %338 = vector.broadcast %cst_153 : f32 to vector<16x1xf32>
    %339 = arith.divf %337, %338 : vector<16x1xf32>
    %340 = vector.broadcast %332 : vector<16x1xf32> to vector<16x32xf32>
    %341 = arith.subf %324, %340 : vector<16x32xf32>
    %cst_154 = arith.constant 9.99999996E-13 : f32
    %342 = vector.broadcast %cst_154 : f32 to vector<16x1xf32>
    %343 = arith.addf %339, %342 : vector<16x1xf32>
    %344 = math.rsqrt %343 : vector<16x1xf32>
    %345 = vector.broadcast %344 : vector<16x1xf32> to vector<16x32xf32>
    %346 = arith.mulf %341, %345 : vector<16x32xf32>
    %347 = vector.broadcast %326 : vector<1x32xf32> to vector<16x32xf32>
    %348 = arith.mulf %346, %347 : vector<16x32xf32>
    %349 = vector.broadcast %328 : vector<1x32xf32> to vector<16x32xf32>
    %350 = arith.addf %348, %349 : vector<16x32xf32>
    %351 = vector.shape_cast %350 : vector<16x32xf32> to vector<2x8x32xf32>
    %352 = vector.extract_strided_slice %351 {offsets = [0, 0, 0], sizes = [2, 1, 32], strides = [1, 1, 1]} : vector<2x8x32xf32> to vector<2x1x32xf32>
    %353 = vector.shape_cast %352 : vector<2x1x32xf32> to vector<2x32xf32>
    %c0_155 = arith.constant 0 : index
    %c0_156 = arith.constant 0 : index
    %354 = vector.load %arg20[%c0_155, %c0_156] : memref<32x32xf32, #tpu.memory_space<vmem>>, vector<32x32xf32>
    %cst_157 = arith.constant dense<0.000000e+00> : vector<2x32xf32>
    %355 = tpu.matmul %353, %354, %cst_157 {dimension_numbers = #tpu.dot_dimension_numbers<[1], [0], [0], [1], [0, 0, 1, 1], [], []>} : vector<2x32xf32>, vector<32x32xf32>, vector<2x32xf32> -> vector<2x32xf32>
    %c0_158 = arith.constant 0 : index
    %c0_159 = arith.constant 0 : index
    %356 = vector.load %arg21[%c0_158, %c0_159] : memref<1x32xf32, #tpu.memory_space<vmem>>, vector<1x32xf32>
    %357 = vector.broadcast %356 : vector<1x32xf32> to vector<2x32xf32>
    %358 = arith.addf %355, %357 : vector<2x32xf32>
    %359 = math.tanh %358 : vector<2x32xf32>
    %c0_160 = arith.constant 0 : index
    %c0_161 = arith.constant 0 : index
    %360 = vector.load %arg22[%c0_160, %c0_161] : memref<32x13xf32, #tpu.memory_space<vmem>>, vector<32x13xf32>
    %cst_162 = arith.constant dense<0.000000e+00> : vector<2x13xf32>
    %361 = tpu.matmul %359, %360, %cst_162 {dimension_numbers = #tpu.dot_dimension_numbers<[1], [0], [0], [1], [0, 0, 1, 1], [], []>} : vector<2x32xf32>, vector<32x13xf32>, vector<2x13xf32> -> vector<2x13xf32>
    %c0_163 = arith.constant 0 : index
    %c0_164 = arith.constant 0 : index
    %362 = vector.load %arg23[%c0_163, %c0_164] : memref<1x13xf32, #tpu.memory_space<vmem>>, vector<1x13xf32>
    %363 = vector.broadcast %362 : vector<1x13xf32> to vector<2x13xf32>
    %364 = arith.addf %361, %363 : vector<2x13xf32>
    %c0_165 = arith.constant 0 : index
    %c0_166 = arith.constant 0 : index
    %365 = vector.load %arg24[%c0_165, %c0_166] : memref<2x13xf32, #tpu.memory_space<vmem>>, vector<2x13xf32>
    tpu.vector_store %arg24[%c0_165, %c0_166], %364 {strides = array<i32>} : memref<2x13xf32, #tpu.memory_space<vmem>>, vector<2x13xf32>,
    return
  }
}

</mosaic_0001>

<llo_original>
// kernel: tpu_custom_call.1
$region0: #{tpu_custom_call.1}
  #allocation0 [shape = 'u32[]', space=smem, size = 0x4, offset = 0x4, fixed_abs, tag = 'smem constant byte address 0x4 - core index']
  #allocation1 [shape = 'u32[72,128]{1,0:T(1,128)}', space=vmem, size = 0x9000, scoped, tag = 'internal scratch']
  %s0 = inlined_call_operand.vmem [shape: s32[16,1], index: 0, kind: input, shape index: {}]
  %s1 = inlined_call_operand.vmem [shape: s32[16,1], index: 1, kind: input, shape index: {}]
  %s2 = inlined_call_operand.vmem [shape: f32[2,8], index: 2, kind: input, shape index: {}]
  %s3 = inlined_call_operand.vmem [shape: f32[100,32], index: 3, kind: input, shape index: {}]
  %s4 = inlined_call_operand.vmem [shape: f32[16,32], index: 4, kind: input, shape index: {}]
  %s5 = inlined_call_operand.vmem [shape: f32[2,32], index: 5, kind: input, shape index: {}]
  %s6 = inlined_call_operand.vmem [shape: f32[1,32], index: 6, kind: input, shape index: {}]
  %s7 = inlined_call_operand.vmem [shape: f32[1,32], index: 7, kind: input, shape index: {}]
  %s8 = inlined_call_operand.vmem [shape: f32[2,32,96], index: 8, kind: input, shape index: {}]
  %s9 = inlined_call_operand.vmem [shape: f32[2,1,96], index: 9, kind: input, shape index: {}]
  %s10 = inlined_call_operand.vmem [shape: f32[2,32,32], index: 10, kind: input, shape index: {}]
  %s11 = inlined_call_operand.vmem [shape: f32[2,1,32], index: 11, kind: input, shape index: {}]
  %s12 = inlined_call_operand.vmem [shape: f32[2,1,32], index: 12, kind: input, shape index: {}]
  %s13 = inlined_call_operand.vmem [shape: f32[2,1,32], index: 13, kind: input, shape index: {}]
  %s14 = inlined_call_operand.vmem [shape: f32[2,32,64], index: 14, kind: input, shape index: {}]
  %s15 = inlined_call_operand.vmem [shape: f32[2,1,64], index: 15, kind: input, shape index: {}]
  %s16 = inlined_call_operand.vmem [shape: f32[2,64,32], index: 16, kind: input, shape index: {}]
  %s17 = inlined_call_operand.vmem [shape: f32[2,1,32], index: 17, kind: input, shape index: {}]
  %s18 = inlined_call_operand.vmem [shape: f32[2,1,32], index: 18, kind: input, shape index: {}]
  %s19 = inlined_call_operand.vmem [shape: f32[2,1,32], index: 19, kind: input, shape index: {}]
  %s20 = inlined_call_operand.vmem [shape: f32[32,32], index: 20, kind: input, shape index: {}]
  %s21 = inlined_call_operand.vmem [shape: f32[1,32], index: 21, kind: input, shape index: {}]
  %s22 = inlined_call_operand.vmem [shape: f32[32,13], index: 22, kind: input, shape index: {}]
  %s23 = inlined_call_operand.vmem [shape: f32[1,13], index: 23, kind: input, shape index: {}]
  %s24 = inlined_call_operand.hbm [shape: f32[2,13], index: 24, kind: output, shape index: {}]
  %s25 = sld [smem:[#allocation0]]
  $region106: #{tpu_custom_call.1} parent=0
    _
  %s27 = ssub.s32 1, %s25
  %s28 = scalar_select 0, %s27, %s25
  $region1: #{tpu_custom_call.1} parent=0
    #allocation2 [shape = 'u8[1024]{0}', space=vmem, size = 0x400, scoped, tag = 'output window, operand 0, single buffered']
    #allocation3 [shape = 's32[1]{0}', space=sflag, size = 0x4, scoped, tag = 'scoped memory for tpu_custom_call.1']
    %29 = vsyncpa [#allocation3], 0
    // Predicated region
    $region2: #{tpu_custom_call.1} parent=1 // pred_check
      _
    $region3: #{tpu_custom_call.1} parent=1 // pred_check_branch
      %31 = sbr.rel (0) target = $region5
    $region4: #{tpu_custom_call.1} parent=1 // pred_region
      _
    $region5: #{tpu_custom_call.1} parent=1 // pred_fallthru
      _
    // Predicated region
    $region6: #{tpu_custom_call.1} parent=1 // pred_check
      _
    $region7: #{tpu_custom_call.1} parent=1 // pred_check_branch
      %33 = sbr.rel (0) target = $region9
    $region8: #{tpu_custom_call.1} parent=1 // pred_region
      _
    $region9: #{tpu_custom_call.1} parent=1 // pred_fallthru
      _
    // Predicated region
    $region10: #{tpu_custom_call.1} parent=1 // pred_check
      _
    $region11: #{tpu_custom_call.1} parent=1 // pred_check_branch
      %35 = sbr.rel (0) target = $region13
    $region12: #{tpu_custom_call.1} parent=1 // pred_region
      _
    $region13: #{tpu_custom_call.1} parent=1 // pred_fallthru
      _
    // Predicated region
    $region14: #{tpu_custom_call.1} parent=1 // pred_check
      _
    $region15: #{tpu_custom_call.1} parent=1 // pred_check_branch
      %37 = sbr.rel (0) target = $region17
    $region16: #{tpu_custom_call.1} parent=1 // pred_region
      _
    $region17: #{tpu_custom_call.1} parent=1 // pred_fallthru
      _
    // Predicated region
    $region18: #{tpu_custom_call.1} parent=1 // pred_check
      _
    $region19: #{tpu_custom_call.1} parent=1 // pred_check_branch
      %39 = sbr.rel (0) target = $region21
    $region20: #{tpu_custom_call.1} parent=1 // pred_region
      _
    $region21: #{tpu_custom_call.1} parent=1 // pred_fallthru
      _
    // Predicated region
    $region22: #{tpu_custom_call.1} parent=1 // pred_check
      _
    $region23: #{tpu_custom_call.1} parent=1 // pred_check_branch
      %41 = sbr.rel (0) target = $region25
    $region24: #{tpu_custom_call.1} parent=1 // pred_region
      _
    $region25: #{tpu_custom_call.1} parent=1 // pred_fallthru
      _
    // Predicated region
    $region26: #{tpu_custom_call.1} parent=1 // pred_check
      _
    $region27: #{tpu_custom_call.1} parent=1 // pred_check_branch
      %43 = sbr.rel (0) target = $region29
    $region28: #{tpu_custom_call.1} parent=1 // pred_region
      _
    $region29: #{tpu_custom_call.1} parent=1 // pred_fallthru
      _
    // Predicated region
    $region30: #{tpu_custom_call.1} parent=1 // pred_check
      _
    $region31: #{tpu_custom_call.1} parent=1 // pred_check_branch
      %45 = sbr.rel (0) target = $region33
    $region32: #{tpu_custom_call.1} parent=1 // pred_region
      _
    $region33: #{tpu_custom_call.1} parent=1 // pred_fallthru
      _
    // Predicated region
    $region34: #{tpu_custom_call.1} parent=1 // pred_check
      _
    $region35: #{tpu_custom_call.1} parent=1 // pred_check_branch
      %47 = sbr.rel (0) target = $region37
    $region36: #{tpu_custom_call.1} parent=1 // pred_region
      _
    $region37: #{tpu_custom_call.1} parent=1 // pred_fallthru
      _
    // Predicated region
    $region38: #{tpu_custom_call.1} parent=1 // pred_check
      _
    $region39: #{tpu_custom_call.1} parent=1 // pred_check_branch
      %49 = sbr.rel (0) target = $region41
    $region40: #{tpu_custom_call.1} parent=1 // pred_region
      _
    $region41: #{tpu_custom_call.1} parent=1 // pred_fallthru
      _
    // Predicated region
    $region42: #{tpu_custom_call.1} parent=1 // pred_check
      _
    $region43: #{tpu_custom_call.1} parent=1 // pred_check_branch
      %51 = sbr.rel (0) target = $region45
    $region44: #{tpu_custom_call.1} parent=1 // pred_region
      _
    $region45: #{tpu_custom_call.1} parent=1 // pred_fallthru
      _
    // Predicated region
    $region46: #{tpu_custom_call.1} parent=1 // pred_check
      _
    $region47: #{tpu_custom_call.1} parent=1 // pred_check_branch
      %53 = sbr.rel (0) target = $region49
    $region48: #{tpu_custom_call.1} parent=1 // pred_region
      _
    $region49: #{tpu_custom_call.1} parent=1 // pred_fallthru
      _
    // Predicated region
    $region50: #{tpu_custom_call.1} parent=1 // pred_check
      _
    $region51: #{tpu_custom_call.1} parent=1 // pred_check_branch
      %55 = sbr.rel (0) target = $region53
    $region52: #{tpu_custom_call.1} parent=1 // pred_region
      _
    $region53: #{tpu_custom_call.1} parent=1 // pred_fallthru
      _
    // Predicated region
    $region54: #{tpu_custom_call.1} parent=1 // pred_check
      _
    $region55: #{tpu_custom_call.1} parent=1 // pred_check_branch
      %57 = sbr.rel (0) target = $region57
    $region56: #{tpu_custom_call.1} parent=1 // pred_region
      _
    $region57: #{tpu_custom_call.1} parent=1 // pred_fallthru
      _
    // Predicated region
    $region58: #{tpu_custom_call.1} parent=1 // pred_check
      _
    $region59: #{tpu_custom_call.1} parent=1 // pred_check_branch
      %59 = sbr.rel (0) target = $region61
    $region60: #{tpu_custom_call.1} parent=1 // pred_region
      _
    $region61: #{tpu_custom_call.1} parent=1 // pred_fallthru
      _
    // Predicated region
    $region62: #{tpu_custom_call.1} parent=1 // pred_check
      _
    $region63: #{tpu_custom_call.1} parent=1 // pred_check_branch
      %61 = sbr.rel (0) target = $region65
    $region64: #{tpu_custom_call.1} parent=1 // pred_region
      _
    $region65: #{tpu_custom_call.1} parent=1 // pred_fallthru
      _
    // Predicated region
    $region66: #{tpu_custom_call.1} parent=1 // pred_check
      _
    $region67: #{tpu_custom_call.1} parent=1 // pred_check_branch
      %63 = sbr.rel (0) target = $region69
    $region68: #{tpu_custom_call.1} parent=1 // pred_region
      _
    $region69: #{tpu_custom_call.1} parent=1 // pred_fallthru
      _
    // Predicated region
    $region70: #{tpu_custom_call.1} parent=1 // pred_check
      _
    $region71: #{tpu_custom_call.1} parent=1 // pred_check_branch
      %65 = sbr.rel (0) target = $region73
    $region72: #{tpu_custom_call.1} parent=1 // pred_region
      _
    $region73: #{tpu_custom_call.1} parent=1 // pred_fallthru
      _
    // Predicated region
    $region74: #{tpu_custom_call.1} parent=1 // pred_check
      _
    $region75: #{tpu_custom_call.1} parent=1 // pred_check_branch
      %67 = sbr.rel (0) target = $region77
    $region76: #{tpu_custom_call.1} parent=1 // pred_region
      _
    $region77: #{tpu_custom_call.1} parent=1 // pred_fallthru
      _
    // Predicated region
    $region78: #{tpu_custom_call.1} parent=1 // pred_check
      _
    $region79: #{tpu_custom_call.1} parent=1 // pred_check_branch
      %69 = sbr.rel (0) target = $region81
    $region80: #{tpu_custom_call.1} parent=1 // pred_region
      _
    $region81: #{tpu_custom_call.1} parent=1 // pred_fallthru
      _
    // Predicated region
    $region82: #{tpu_custom_call.1} parent=1 // pred_check
      _
    $region83: #{tpu_custom_call.1} parent=1 // pred_check_branch
      %71 = sbr.rel (0) target = $region85
    $region84: #{tpu_custom_call.1} parent=1 // pred_region
      _
    $region85: #{tpu_custom_call.1} parent=1 // pred_fallthru
      _
    // Predicated region
    $region86: #{tpu_custom_call.1} parent=1 // pred_check
      _
    $region87: #{tpu_custom_call.1} parent=1 // pred_check_branch
      %73 = sbr.rel (0) target = $region89
    $region88: #{tpu_custom_call.1} parent=1 // pred_region
      _
    $region89: #{tpu_custom_call.1} parent=1 // pred_fallthru
      _
    // Predicated region
    $region90: #{tpu_custom_call.1} parent=1 // pred_check
      _
    $region91: #{tpu_custom_call.1} parent=1 // pred_check_branch
      %75 = sbr.rel (0) target = $region93
    $region92: #{tpu_custom_call.1} parent=1 // pred_region
      _
    $region93: #{tpu_custom_call.1} parent=1 // pred_fallthru
      _
    // Predicated region
    $region94: #{tpu_custom_call.1} parent=1 // pred_check
      _
    $region95: #{tpu_custom_call.1} parent=1 // pred_check_branch
      %77 = sbr.rel (0) target = $region97
    $region96: #{tpu_custom_call.1} parent=1 // pred_region
      _
    $region97: #{tpu_custom_call.1} parent=1 // pred_fallthru
      _
    %v78 = vld [vmem:[%s0] sm:$0xff]
    %v79 = vld [vmem:[%s0 + $0x8] sm:$0xff]
    %v80 = vlaneseq
    %v81 = vand.u32 %v80, 127
    %82 = vset.pattern.permute.xlu0 0
    %83 = vperm.xlu0 %82, %v78
    %v84 = vpop.permute.xlu0 %83
    %85 = vset.pattern.permute.xlu0 0
    %86 = vperm.xlu0 %85, %v79
    %v87 = vpop.permute.xlu0 %86
    %vm88 = vcmp.eq.s32.totalorder %v84, %v81
    %vm89 = vcmp.eq.s32.totalorder %v87, %v81
    %v90 = vsel %vm88, 1, 0
    %v91 = vsel %vm89, 1, 0
    %v92 = vcvt.s32.f32 %v90
    %v93 = vcvt.s32.f32 %v91
    %v94 = vld [vmem:[%s3] sm:$0xff]
    %v95 = vld [vmem:[%s3 + $0x8] sm:$0xff]
    %v96 = vld [vmem:[%s3 + $0x10] sm:$0xff]
    %v97 = vld [vmem:[%s3 + $0x18] sm:$0xff]
    %v98 = vld [vmem:[%s3 + $0x20] sm:$0xff]
    %v99 = vld [vmem:[%s3 + $0x28] sm:$0xff]
    %v100 = vld [vmem:[%s3 + $0x30] sm:$0xff]
    %v101 = vld [vmem:[%s3 + $0x38] sm:$0xff]
    %v102 = vld [vmem:[%s3 + $0x40] sm:$0xff]
    %v103 = vld [vmem:[%s3 + $0x48] sm:$0xff]
    %v104 = vld [vmem:[%s3 + $0x50] sm:$0xff]
    %v105 = vld [vmem:[%s3 + $0x58] sm:$0xff]
    %v106 = vld [vmem:[%s3 + $0x60] sm:$0xf]
    %v107 = vld [vmem:[%s4] sm:$0xff]
    %v108 = vld [vmem:[%s1] sm:$0xff]
    %v109 = vld [vmem:[%s1 + $0x8] sm:$0xff]
    %vm110 = vcmp.eq.s32.totalorder %v108, 0
    %vm111 = vcmp.eq.s32.totalorder %v109, 0
    %v112 = vld [vmem:[%s5] sm:$0x1]
    %v113 = vld [vmem:[%s5 + $0x1] sm:$0x1]
    %v114 = vsel %vm110, 1, 0
    %v115 = vsel %vm111, 1, 0
    %116 = vset.pattern.permute.xlu0 0
    %117 = vperm.xlu0 %116, %v114
    %v118 = vpop.permute.xlu0 %117
    %119 = vset.pattern.permute.xlu0 0
    %120 = vperm.xlu0 %119, %v115
    %v121 = vpop.permute.xlu0 %120
    %vm122 = vcmp.eq.s32.totalorder %v118, 1
    %vm123 = vcmp.eq.s32.totalorder %v121, 1
    %v124 = vperm.slane %v112, 0
    %v125 = vperm.slane %v113, 0
    %v126 = vsel %vm122, %v124, %v125
    %v127 = vsel %vm123, %v124, %v125
    %vm128 = vcmask 818176
    %v130 = vsel %vm128, %v92, 0
    %v133 = vsel %vm128, %v93, 0
    %vm135 = vcmask 1043456
    %v137 = vsel %vm135, %v106, 0
    %139 = vmatpush.msra.mxu0 0.0
    %140 = vmatpush.msra.mxu0 0.0
    %141 = vmatpush.msra.mxu0 0.0
    %142 = vmatpush.msra.mxu0 %v137
    %143 = vmatpush.msra.mxu0 %v105
    %144 = vmatpush.msra.mxu0 %v104
    %145 = vmatpush.msra.mxu0 %v103
    %146 = vmatpush.msra.mxu0 %v102
    %147 = vmatpush.msra.mxu0 %v101
    %148 = vmatpush.msra.mxu0 %v100
    %149 = vmatpush.msra.mxu0 %v99
    %150 = vmatpush.msra.mxu0 %v98
    %151 = vmatpush.msra.mxu0 %v97
    %152 = vmatpush.msra.mxu0 %v96
    %153 = vmatpush.msra.mxu0 %v95
    %154 = vmatpush.msra.mxu0 %v94
    %155 = vmatmul.f32.gmra.mxu0 %v130
    %v156 = vpop.f32.mrf.mxu0
    %v157 = vadd.f32 %v107, %v156
    %158 = vmatmul.f32.gmra.mxu0 %v133
    %v159 = vpop.f32.mrf.mxu0
    %v160 = vadd.f32 %v107, %v159
    %161 = vdwg.mxu0
    %v162 = vadd.f32 %v157, %v126
    %v163 = vadd.f32 %v160, %v127
    %v164 = vld [vmem:[%s6] sm:$0x1]
    %v165 = vld [vmem:[%s7] sm:$0x1]
    %vm166 = vcmask 261120
    %v167 = vsel %vm166, %v162, 0.0
    %168 = vadd.xlane.f32.xlu0 %v167
    %v169 = vpop.xlane.xlu0 %168
    %v170 = vsel %vm166, %v163, 0.0
    %171 = vadd.xlane.f32.xlu0 %v170
    %v172 = vpop.xlane.xlu0 %171
    %v173 = vrcp.pop 32.0
    %v174 = vmul.f32 32.0, %v173
    %v175 = vsub.f32 1.0, %v174
    %v176 = vmul.f32 %v173, %v175
    %v177 = vadd.f32 %v173, %v176
    %vm178 = vweird.f32 %v173
    %v179 = vsel %vm178, %v173, %v177
    %v180 = vmul.f32 %v169, %v179
    %v181 = vmul.f32 %v172, %v179
    %v182 = vsub.f32 %v162, %v180
    %v183 = vsub.f32 %v163, %v181
    %v184 = vmul.f32 %v182, %v182
    %v185 = vmul.f32 %v183, %v183
    %v186 = vsel %vm166, %v184, 0.0
    %187 = vadd.xlane.f32.xlu0 %v186
    %v188 = vpop.xlane.xlu0 %187
    %v189 = vsel %vm166, %v185, 0.0
    %190 = vadd.xlane.f32.xlu0 %v189
    %v191 = vpop.xlane.xlu0 %190
    %v192 = vmul.f32 %v188, %v179
    %v193 = vmul.f32 %v191, %v179
    %v194 = vadd.f32 %v192, 1e-12
    %v195 = vadd.f32 %v193, 1e-12
    %v196 = vrsqrt.pop %v194
    %v197 = vmul.f32 %v196, %v194
    %v198 = vmul.f32 %v197, %v196
    %v199 = vmul.f32 0.5, %v198
    %v200 = vsub.f32 1.5, %v199
    %v201 = vmul.f32 %v196, %v200
    %vm202 = vweird.f32 %v194
    %vm203 = vweird.f32 %v196
    %vm204 = vmor %vm202, %vm203
    %v205 = vsel %vm204, %v196, %v201
    %v206 = vrsqrt.pop %v195
    %v207 = vmul.f32 %v206, %v195
    %v208 = vmul.f32 %v207, %v206
    %v209 = vmul.f32 0.5, %v208
    %v210 = vsub.f32 1.5, %v209
    %v211 = vmul.f32 %v206, %v210
    %vm212 = vweird.f32 %v195
    %vm213 = vweird.f32 %v206
    %vm214 = vmor %vm212, %vm213
    %v215 = vsel %vm214, %v206, %v211
    %v216 = vmul.f32 %v182, %v205
    %v217 = vmul.f32 %v183, %v215
    %v219 = vperm.slane %v164, 0
    %v221 = vmul.f32 %v216, %v219
    %v222 = vmul.f32 %v217, %v219
    %v224 = vperm.slane %v165, 0
    %v226 = vadd.f32 %v221, %v224
    %v227 = vadd.f32 %v222, %v224
    %v228 = vld [vmem:[%s2] sm:$0x3]
    %v229 = vsub.f32 1.0, %v228
    %v230 = vmul.f32 %v229, -10000.0
    %v232 = vrot.slane %v230, 1
    %v233 = vld [vmem:[%s8] sm:$0xff]
    %v234 = vld [vmem:[%s8 + $0x8] sm:$0xff]
    %v235 = vld [vmem:[%s8 + $0x10] sm:$0xff]
    %v236 = vld [vmem:[%s8 + $0x18] sm:$0xff]
    %v237 = vld [vmem:[%s9] sm:$0x1]
    %v239 = vperm.slane %v237, 0
    %v242 = vsel %vm166, %v226, 0
    %v245 = vsel %vm166, %v227, 0
    %247 = vmatpush.msra.mxu0 0.0
    %248 = vmatpush.msra.mxu0 0.0
    %249 = vmatpush.msra.mxu0 0.0
    %250 = vmatpush.msra.mxu0 0.0
    %251 = vmatpush.msra.mxu0 0.0
    %252 = vmatpush.msra.mxu0 0.0
    %253 = vmatpush.msra.mxu0 0.0
    %254 = vmatpush.msra.mxu0 0.0
    %255 = vmatpush.msra.mxu0 0.0
    %256 = vmatpush.msra.mxu0 0.0
    %257 = vmatpush.msra.mxu0 0.0
    %258 = vmatpush.msra.mxu0 0.0
    %259 = vmatpush.msra.mxu0 %v236
    %260 = vmatpush.msra.mxu0 %v235
    %261 = vmatpush.msra.mxu0 %v234
    %262 = vmatpush.msra.mxu0 %v233
    %263 = vmatmul.f32.gmra.mxu0 %v242
    %v264 = vpop.f32.mrf.mxu0
    %v265 = vadd.f32 %v239, %v264
    %266 = vmatmul.f32.gmra.mxu0 %v245
    %v267 = vpop.f32.mrf.mxu0
    %v268 = vadd.f32 %v239, %v267
    %269 = vdwg.mxu0
    %v270 = vld [vmem:[%s10] sm:$0xff]
    %v271 = vld [vmem:[%s10 + $0x8] sm:$0xff]
    %v272 = vld [vmem:[%s10 + $0x10] sm:$0xff]
    %v273 = vld [vmem:[%s10 + $0x18] sm:$0xff]
    %275 = vrot.lane.b32.xlu0 %v265, 96
    %v276 = vpop.permute.xlu0 %275
    %vm277 = vcmask 130048
    %v278 = vsel %vm277, %v265, 0
    %v280 = vsel %vm277, %v276, 0
    %282 = vmatpush.xpose.msra.mxu0 0.0
    %283 = vmatpush.xpose.msra.mxu0 0.0
    %284 = vmatpush.xpose.msra.mxu0 0.0
    %285 = vmatpush.xpose.msra.mxu0 0.0
    %286 = vmatpush.xpose.msra.mxu0 0.0
    %287 = vmatpush.xpose.msra.mxu0 0.0
    %288 = vmatpush.xpose.msra.mxu0 0.0
    %289 = vmatpush.xpose.msra.mxu0 0.0
    %290 = vmatpush.xpose.msra.mxu0 0.0
    %291 = vmatpush.xpose.msra.mxu0 0.0
    %292 = vmatpush.xpose.msra.mxu0 0.0
    %293 = vmatpush.xpose.msra.mxu0 0.0
    %294 = vmatpush.xpose.msra.mxu0 0.0
    %295 = vmatpush.xpose.msra.mxu0 0.0
    %296 = vmatpush.xpose.msra.mxu0 0.0
    %297 = vmatpush.xpose.msra.mxu0 %v280
    %298 = vmatmul.f32.gmra.mxu0 %v278
    %v299 = vpop.f32.mrf.mxu0
    %v300 = vadd.f32 0.0, %v299
    %301 = vdwg.mxu0
    %303 = vrot.lane.b32.xlu0 %v268, 96
    %v304 = vpop.permute.xlu0 %303
    %v305 = vsel %vm277, %v268, 0
    %v307 = vsel %vm277, %v304, 0
    %309 = vmatpush.xpose.msra.mxu0 0.0
    %310 = vmatpush.xpose.msra.mxu0 0.0
    %311 = vmatpush.xpose.msra.mxu0 0.0
    %312 = vmatpush.xpose.msra.mxu0 0.0
    %313 = vmatpush.xpose.msra.mxu0 0.0
    %314 = vmatpush.xpose.msra.mxu0 0.0
    %315 = vmatpush.xpose.msra.mxu0 0.0
    %316 = vmatpush.xpose.msra.mxu0 0.0
    %317 = vmatpush.xpose.msra.mxu0 0.0
    %318 = vmatpush.xpose.msra.mxu0 0.0
    %319 = vmatpush.xpose.msra.mxu0 0.0
    %320 = vmatpush.xpose.msra.mxu0 0.0
    %321 = vmatpush.xpose.msra.mxu0 0.0
    %322 = vmatpush.xpose.msra.mxu0 0.0
    %323 = vmatpush.xpose.msra.mxu0 0.0
    %324 = vmatpush.xpose.msra.mxu0 %v307
    %325 = vmatmul.f32.gmra.mxu0 %v305
    %v326 = vpop.f32.mrf.mxu0
    %v327 = vadd.f32 0.0, %v326
    %328 = vdwg.mxu0
    %v329 = vmul.f32 %v300, 0.25
    %v330 = vmul.f32 %v327, 0.25
    %v331 = vperm.slane %v230, 0
    %v332 = vperm.slane %v232, 0
    %v335 = vadd.f32 %v329, %v331
    %v336 = vadd.f32 %v330, %v332
    %vm337 = vcmask 64512
    %v338 = vsel %vm337, %v335, -inf
    %339 = vmax.xlane.f32.xlu0 %v338
    %v340 = vpop.xlane.xlu0 %339
    %v341 = vsel %vm337, %v336, -inf
    %342 = vmax.xlane.f32.xlu0 %v341
    %v343 = vpop.xlane.xlu0 %342
    %v344 = vsub.f32 %v335, %v340
    %v345 = vsub.f32 %v336, %v343
    %v346 = vmul.f32 %v344, 1.442695
    %v347 = vpow.pop %v346
    %v348 = vmul.f32 %v345, 1.442695
    %v349 = vpow.pop %v348
    %v350 = vsel %vm337, %v347, 0.0
    %351 = vadd.xlane.f32.xlu0 %v350
    %v352 = vpop.xlane.xlu0 %351
    %v353 = vsel %vm337, %v349, 0.0
    %354 = vadd.xlane.f32.xlu0 %v353
    %v355 = vpop.xlane.xlu0 %354
    %v356 = vrcp.pop %v352
    %v357 = vrcp.pop %v355
    %v358 = vmul.f32 %v347, %v356
    %v359 = vmul.f32 %v349, %v357
    %360 = vrot.lane.b32.xlu0 %v265, 64
    %v361 = vpop.permute.xlu0 %360
    %v364 = vsel %vm337, %v358, 0
    %366 = vmatpush.msra.mxu0 0.0
    %367 = vmatpush.msra.mxu0 0.0
    %368 = vmatpush.msra.mxu0 0.0
    %369 = vmatpush.msra.mxu0 0.0
    %370 = vmatpush.msra.mxu0 0.0
    %371 = vmatpush.msra.mxu0 0.0
    %372 = vmatpush.msra.mxu0 0.0
    %373 = vmatpush.msra.mxu0 0.0
    %374 = vmatpush.msra.mxu0 0.0
    %375 = vmatpush.msra.mxu0 0.0
    %376 = vmatpush.msra.mxu0 0.0
    %377 = vmatpush.msra.mxu0 0.0
    %378 = vmatpush.msra.mxu0 0.0
    %379 = vmatpush.msra.mxu0 0.0
    %380 = vmatpush.msra.mxu0 0.0
    %381 = vmatpush.msra.mxu0 %v361
    %382 = vmatmul.f32.gmra.mxu0 %v364
    %v383 = vpop.f32.mrf.mxu0
    %v384 = vadd.f32 0.0, %v383
    %385 = vdwg.mxu0
    %386 = vrot.lane.b32.xlu0 %v268, 64
    %v387 = vpop.permute.xlu0 %386
    %v390 = vsel %vm337, %v359, 0
    %392 = vmatpush.msra.mxu0 0.0
    %393 = vmatpush.msra.mxu0 0.0
    %394 = vmatpush.msra.mxu0 0.0
    %395 = vmatpush.msra.mxu0 0.0
    %396 = vmatpush.msra.mxu0 0.0
    %397 = vmatpush.msra.mxu0 0.0
    %398 = vmatpush.msra.mxu0 0.0
    %399 = vmatpush.msra.mxu0 0.0
    %400 = vmatpush.msra.mxu0 0.0
    %401 = vmatpush.msra.mxu0 0.0
    %402 = vmatpush.msra.mxu0 0.0
    %403 = vmatpush.msra.mxu0 0.0
    %404 = vmatpush.msra.mxu0 0.0
    %405 = vmatpush.msra.mxu0 0.0
    %406 = vmatpush.msra.mxu0 0.0
    %407 = vmatpush.msra.mxu0 %v387
    %408 = vmatmul.f32.gmra.mxu0 %v390
    %v409 = vpop.f32.mrf.mxu0
    %v410 = vadd.f32 0.0, %v409
    %411 = vdwg.mxu0
    %412 = vrot.lane.b32.xlu0 %v265, 112
    %v413 = vpop.permute.xlu0 %412
    %414 = vrot.lane.b32.xlu0 %v265, 80
    %v415 = vpop.permute.xlu0 %414
    %v416 = vsel %vm277, %v413, 0
    %v418 = vsel %vm277, %v415, 0
    %420 = vmatpush.xpose.msra.mxu0 0.0
    %421 = vmatpush.xpose.msra.mxu0 0.0
    %422 = vmatpush.xpose.msra.mxu0 0.0
    %423 = vmatpush.xpose.msra.mxu0 0.0
    %424 = vmatpush.xpose.msra.mxu0 0.0
    %425 = vmatpush.xpose.msra.mxu0 0.0
    %426 = vmatpush.xpose.msra.mxu0 0.0
    %427 = vmatpush.xpose.msra.mxu0 0.0
    %428 = vmatpush.xpose.msra.mxu0 0.0
    %429 = vmatpush.xpose.msra.mxu0 0.0
    %430 = vmatpush.xpose.msra.mxu0 0.0
    %431 = vmatpush.xpose.msra.mxu0 0.0
    %432 = vmatpush.xpose.msra.mxu0 0.0
    %433 = vmatpush.xpose.msra.mxu0 0.0
    %434 = vmatpush.xpose.msra.mxu0 0.0
    %435 = vmatpush.xpose.msra.mxu0 %v418
    %436 = vmatmul.f32.gmra.mxu0 %v416
    %v437 = vpop.f32.mrf.mxu0
    %v438 = vadd.f32 0.0, %v437
    %439 = vdwg.mxu0
    %440 = vrot.lane.b32.xlu0 %v268, 112
    %v441 = vpop.permute.xlu0 %440
    %442 = vrot.lane.b32.xlu0 %v268, 80
    %v443 = vpop.permute.xlu0 %442
    %v444 = vsel %vm277, %v441, 0
    %v446 = vsel %vm277, %v443, 0
    %448 = vmatpush.xpose.msra.mxu0 0.0
    %449 = vmatpush.xpose.msra.mxu0 0.0
    %450 = vmatpush.xpose.msra.mxu0 0.0
    %451 = vmatpush.xpose.msra.mxu0 0.0
    %452 = vmatpush.xpose.msra.mxu0 0.0
    %453 = vmatpush.xpose.msra.mxu0 0.0
    %454 = vmatpush.xpose.msra.mxu0 0.0
    %455 = vmatpush.xpose.msra.mxu0 0.0
    %456 = vmatpush.xpose.msra.mxu0 0.0
    %457 = vmatpush.xpose.msra.mxu0 0.0
    %458 = vmatpush.xpose.msra.mxu0 0.0
    %459 = vmatpush.xpose.msra.mxu0 0.0
    %460 = vmatpush.xpose.msra.mxu0 0.0
    %461 = vmatpush.xpose.msra.mxu0 0.0
    %462 = vmatpush.xpose.msra.mxu0 0.0
    %463 = vmatpush.xpose.msra.mxu0 %v446
    %464 = vmatmul.f32.gmra.mxu0 %v444
    %v465 = vpop.f32.mrf.mxu0
    %v466 = vadd.f32 0.0, %v465
    %467 = vdwg.mxu0
    %v468 = vmul.f32 %v438, 0.25
    %v469 = vmul.f32 %v466, 0.25
    %v470 = vadd.f32 %v468, %v331
    %v471 = vadd.f32 %v469, %v332
    %v472 = vsel %vm337, %v470, -inf
    %473 = vmax.xlane.f32.xlu0 %v472
    %v474 = vpop.xlane.xlu0 %473
    %v475 = vsel %vm337, %v471, -inf
    %476 = vmax.xlane.f32.xlu0 %v475
    %v477 = vpop.xlane.xlu0 %476
    %v478 = vsub.f32 %v470, %v474
    %v479 = vsub.f32 %v471, %v477
    %v480 = vmul.f32 %v478, 1.442695
    %v481 = vpow.pop %v480
    %v482 = vmul.f32 %v479, 1.442695
    %v483 = vpow.pop %v482
    %v484 = vsel %vm337, %v481, 0.0
    %485 = vadd.xlane.f32.xlu0 %v484
    %v486 = vpop.xlane.xlu0 %485
    %v487 = vsel %vm337, %v483, 0.0
    %488 = vadd.xlane.f32.xlu0 %v487
    %v489 = vpop.xlane.xlu0 %488
    %v490 = vrcp.pop %v486
    %v491 = vrcp.pop %v489
    %v492 = vmul.f32 %v481, %v490
    %v493 = vmul.f32 %v483, %v491
    %494 = vrot.lane.b32.xlu0 %v265, 48
    %v495 = vpop.permute.xlu0 %494
    %v498 = vsel %vm337, %v492, 0
    %500 = vmatpush.msra.mxu0 0.0
    %501 = vmatpush.msra.mxu0 0.0
    %502 = vmatpush.msra.mxu0 0.0
    %503 = vmatpush.msra.mxu0 0.0
    %504 = vmatpush.msra.mxu0 0.0
    %505 = vmatpush.msra.mxu0 0.0
    %506 = vmatpush.msra.mxu0 0.0
    %507 = vmatpush.msra.mxu0 0.0
    %508 = vmatpush.msra.mxu0 0.0
    %509 = vmatpush.msra.mxu0 0.0
    %510 = vmatpush.msra.mxu0 0.0
    %511 = vmatpush.msra.mxu0 0.0
    %512 = vmatpush.msra.mxu0 0.0
    %513 = vmatpush.msra.mxu0 0.0
    %514 = vmatpush.msra.mxu0 0.0
    %515 = vmatpush.msra.mxu0 %v495
    %516 = vmatmul.f32.gmra.mxu0 %v498
    %v517 = vpop.f32.mrf.mxu0
    %v518 = vadd.f32 0.0, %v517
    %519 = vdwg.mxu0
    %520 = vrot.lane.b32.xlu0 %v268, 48
    %v521 = vpop.permute.xlu0 %520
    %v524 = vsel %vm337, %v493, 0
    %526 = vmatpush.msra.mxu0 0.0
    %527 = vmatpush.msra.mxu0 0.0
    %528 = vmatpush.msra.mxu0 0.0
    %529 = vmatpush.msra.mxu0 0.0
    %530 = vmatpush.msra.mxu0 0.0
    %531 = vmatpush.msra.mxu0 0.0
    %532 = vmatpush.msra.mxu0 0.0
    %533 = vmatpush.msra.mxu0 0.0
    %534 = vmatpush.msra.mxu0 0.0
    %535 = vmatpush.msra.mxu0 0.0
    %536 = vmatpush.msra.mxu0 0.0
    %537 = vmatpush.msra.mxu0 0.0
    %538 = vmatpush.msra.mxu0 0.0
    %539 = vmatpush.msra.mxu0 0.0
    %540 = vmatpush.msra.mxu0 0.0
    %541 = vmatpush.msra.mxu0 %v521
    %542 = vmatmul.f32.gmra.mxu0 %v524
    %v543 = vpop.f32.mrf.mxu0
    %v544 = vadd.f32 0.0, %v543
    %545 = vdwg.mxu0
    %v547 = vsel %vm277, %v518, 0
    %v550 = vsel %vm277, %v544, 0
    %552 = vmatpush.msra.mxu0 0.0
    %553 = vmatpush.msra.mxu0 0.0
    %554 = vmatpush.msra.mxu0 0.0
    %555 = vmatpush.msra.mxu0 0.0
    %556 = vmatpush.msra.mxu0 0.0
    %557 = vmatpush.msra.mxu0 0.0
    %558 = vmatpush.msra.mxu0 0.0
    %559 = vmatpush.msra.mxu0 0.0
    %560 = vmatpush.msra.mxu0 0.0
    %561 = vmatpush.msra.mxu0 0.0
    %562 = vmatpush.msra.mxu0 0.0
    %563 = vmatpush.msra.mxu0 0.0
    %564 = vmatpush.msra.mxu0 0.0
    %565 = vmatpush.msra.mxu0 0.0
    %566 = vmatpush.msra.mxu0 %v273
    %567 = vmatpush.msra.mxu0 %v272
    %568 = vmatmul.f32.gmra.mxu0 %v547
    %v569 = vpop.f32.mrf.mxu0
    %v570 = vadd.f32 0.0, %v569
    %571 = vmatmul.f32.gmra.mxu0 %v550
    %v572 = vpop.f32.mrf.mxu0
    %v573 = vadd.f32 0.0, %v572
    %574 = vdwg.mxu0
    %v576 = vsel %vm277, %v384, 0
    %v579 = vsel %vm277, %v410, 0
    %581 = vmatpush.msra.mxu0 0.0
    %582 = vmatpush.msra.mxu0 0.0
    %583 = vmatpush.msra.mxu0 0.0
    %584 = vmatpush.msra.mxu0 0.0
    %585 = vmatpush.msra.mxu0 0.0
    %586 = vmatpush.msra.mxu0 0.0
    %587 = vmatpush.msra.mxu0 0.0
    %588 = vmatpush.msra.mxu0 0.0
    %589 = vmatpush.msra.mxu0 0.0
    %590 = vmatpush.msra.mxu0 0.0
    %591 = vmatpush.msra.mxu0 0.0
    %592 = vmatpush.msra.mxu0 0.0
    %593 = vmatpush.msra.mxu0 0.0
    %594 = vmatpush.msra.mxu0 0.0
    %595 = vmatpush.msra.mxu0 %v271
    %596 = vmatpush.msra.mxu0 %v270
    %597 = vmatmul.f32.gmra.mxu0 %v576
    %v598 = vpop.f32.mrf.mxu0
    %v599 = vadd.f32 %v570, %v598
    %600 = vmatmul.f32.gmra.mxu0 %v579
    %v601 = vpop.f32.mrf.mxu0
    %v602 = vadd.f32 %v573, %v601
    %603 = vdwg.mxu0
    %v604 = vld [vmem:[%s11] sm:$0x1]
    %v606 = vperm.slane %v604, 0
    %v608 = vadd.f32 %v599, %v606
    %v609 = vadd.f32 %v602, %v606
    %v610 = vadd.f32 %v226, %v608
    %v611 = vadd.f32 %v227, %v609
    %v612 = vld [vmem:[%s12] sm:$0x1]
    %v613 = vld [vmem:[%s13] sm:$0x1]
    %v614 = vsel %vm166, %v610, 0.0
    %615 = vadd.xlane.f32.xlu0 %v614
    %v616 = vpop.xlane.xlu0 %615
    %v617 = vsel %vm166, %v611, 0.0
    %618 = vadd.xlane.f32.xlu0 %v617
    %v619 = vpop.xlane.xlu0 %618
    %v620 = vmul.f32 %v616, %v179
    %v621 = vmul.f32 %v619, %v179
    %v622 = vsub.f32 %v610, %v620
    %v623 = vsub.f32 %v611, %v621
    %v624 = vmul.f32 %v622, %v622
    %v625 = vmul.f32 %v623, %v623
    %v626 = vsel %vm166, %v624, 0.0
    %627 = vadd.xlane.f32.xlu0 %v626
    %v628 = vpop.xlane.xlu0 %627
    %v629 = vsel %vm166, %v625, 0.0
    %630 = vadd.xlane.f32.xlu0 %v629
    %v631 = vpop.xlane.xlu0 %630
    %v632 = vmul.f32 %v628, %v179
    %v633 = vmul.f32 %v631, %v179
    %v634 = vadd.f32 %v632, 1e-12
    %v635 = vadd.f32 %v633, 1e-12
    %v636 = vrsqrt.pop %v634
    %v637 = vmul.f32 %v636, %v634
    %v638 = vmul.f32 %v637, %v636
    %v639 = vmul.f32 0.5, %v638
    %v640 = vsub.f32 1.5, %v639
    %v641 = vmul.f32 %v636, %v640
    %vm642 = vweird.f32 %v634
    %vm643 = vweird.f32 %v636
    %vm644 = vmor %vm642, %vm643
    %v645 = vsel %vm644, %v636, %v641
    %v646 = vrsqrt.pop %v635
    %v647 = vmul.f32 %v646, %v635
    %v648 = vmul.f32 %v647, %v646
    %v649 = vmul.f32 0.5, %v648
    %v650 = vsub.f32 1.5, %v649
    %v651 = vmul.f32 %v646, %v650
    %vm652 = vweird.f32 %v635
    %vm653 = vweird.f32 %v646
    %vm654 = vmor %vm652, %vm653
    %v655 = vsel %vm654, %v646, %v651
    %v656 = vmul.f32 %v622, %v645
    %v657 = vmul.f32 %v623, %v655
    %v659 = vperm.slane %v612, 0
    %v661 = vmul.f32 %v656, %v659
    %v662 = vmul.f32 %v657, %v659
    %v664 = vperm.slane %v613, 0
    %v666 = vadd.f32 %v661, %v664
    %v667 = vadd.f32 %v662, %v664
    %v668 = vld [vmem:[%s14] sm:$0xff]
    %v669 = vld [vmem:[%s14 + $0x8] sm:$0xff]
    %v670 = vld [vmem:[%s14 + $0x10] sm:$0xff]
    %v671 = vld [vmem:[%s14 + $0x18] sm:$0xff]
    %v672 = vld [vmem:[%s15] sm:$0x1]
    %v674 = vperm.slane %v672, 0
    %v677 = vsel %vm166, %v666, 0
    %v680 = vsel %vm166, %v667, 0
    %682 = vmatpush.msra.mxu0 0.0
    %683 = vmatpush.msra.mxu0 0.0
    %684 = vmatpush.msra.mxu0 0.0
    %685 = vmatpush.msra.mxu0 0.0
    %686 = vmatpush.msra.mxu0 0.0
    %687 = vmatpush.msra.mxu0 0.0
    %688 = vmatpush.msra.mxu0 0.0
    %689 = vmatpush.msra.mxu0 0.0
    %690 = vmatpush.msra.mxu0 0.0
    %691 = vmatpush.msra.mxu0 0.0
    %692 = vmatpush.msra.mxu0 0.0
    %693 = vmatpush.msra.mxu0 0.0
    %694 = vmatpush.msra.mxu0 %v671
    %695 = vmatpush.msra.mxu0 %v670
    %696 = vmatpush.msra.mxu0 %v669
    %697 = vmatpush.msra.mxu0 %v668
    %698 = vmatmul.f32.gmra.mxu0 %v677
    %v699 = vpop.f32.mrf.mxu0
    %v700 = vadd.f32 %v674, %v699
    %701 = vmatmul.f32.gmra.mxu0 %v680
    %v702 = vpop.f32.mrf.mxu0
    %v703 = vadd.f32 %v674, %v702
    %704 = vdwg.mxu0
    %v705 = vmul.f32 %v700, 0.5
    %v706 = vmul.f32 %v703, 0.5
    %v707 = vmul.f32 %v700, 0.044715
    %v708 = vmul.f32 %v703, 0.044715
    %v709 = vmul.f32 %v707, %v700
    %v710 = vmul.f32 %v708, %v703
    %v711 = vmul.f32 %v709, %v700
    %v712 = vmul.f32 %v710, %v703
    %v713 = vadd.f32 %v700, %v711
    %v714 = vadd.f32 %v703, %v712
    %v715 = vmul.f32 %v713, 0.7978846
    %v716 = vmul.f32 %v714, 0.7978846
    %v717 = vtanh.pop %v715
    %v718 = vtanh.pop %v716
    %v719 = vadd.f32 %v717, 1.0
    %v720 = vadd.f32 %v718, 1.0
    %v721 = vmul.f32 %v705, %v719
    %v722 = vmul.f32 %v706, %v720
    %v723 = vld [vmem:[%s16] sm:$0xff]
    %v724 = vld [vmem:[%s16 + $0x8] sm:$0xff]
    %v725 = vld [vmem:[%s16 + $0x10] sm:$0xff]
    %v726 = vld [vmem:[%s16 + $0x18] sm:$0xff]
    %v727 = vld [vmem:[%s16 + $0x20] sm:$0xff]
    %v728 = vld [vmem:[%s16 + $0x28] sm:$0xff]
    %v729 = vld [vmem:[%s16 + $0x30] sm:$0xff]
    %v730 = vld [vmem:[%s16 + $0x38] sm:$0xff]
    %v731 = vld [vmem:[%s17] sm:$0x1]
    %v733 = vperm.slane %v731, 0
    %vm735 = vcmask 523264
    %v737 = vsel %vm735, %v721, 0
    %v740 = vsel %vm735, %v722, 0
    %742 = vmatpush.msra.mxu0 0.0
    %743 = vmatpush.msra.mxu0 0.0
    %744 = vmatpush.msra.mxu0 0.0
    %745 = vmatpush.msra.mxu0 0.0
    %746 = vmatpush.msra.mxu0 0.0
    %747 = vmatpush.msra.mxu0 0.0
    %748 = vmatpush.msra.mxu0 0.0
    %749 = vmatpush.msra.mxu0 0.0
    %750 = vmatpush.msra.mxu0 %v730
    %751 = vmatpush.msra.mxu0 %v729
    %752 = vmatpush.msra.mxu0 %v728
    %753 = vmatpush.msra.mxu0 %v727
    %754 = vmatpush.msra.mxu0 %v726
    %755 = vmatpush.msra.mxu0 %v725
    %756 = vmatpush.msra.mxu0 %v724
    %757 = vmatpush.msra.mxu0 %v723
    %758 = vmatmul.f32.gmra.mxu0 %v737
    %v759 = vpop.f32.mrf.mxu0
    %v760 = vadd.f32 %v733, %v759
    %761 = vmatmul.f32.gmra.mxu0 %v740
    %v762 = vpop.f32.mrf.mxu0
    %v763 = vadd.f32 %v733, %v762
    %764 = vdwg.mxu0
    %v765 = vadd.f32 %v666, %v760
    %v766 = vadd.f32 %v667, %v763
    %v767 = vld [vmem:[%s18] sm:$0x1]
    %v768 = vld [vmem:[%s19] sm:$0x1]
    %v769 = vsel %vm166, %v765, 0.0
    %770 = vadd.xlane.f32.xlu0 %v769
    %v771 = vpop.xlane.xlu0 %770
    %v772 = vsel %vm166, %v766, 0.0
    %773 = vadd.xlane.f32.xlu0 %v772
    %v774 = vpop.xlane.xlu0 %773
    %v775 = vmul.f32 %v771, %v179
    %v776 = vmul.f32 %v774, %v179
    %v777 = vsub.f32 %v765, %v775
    %v778 = vsub.f32 %v766, %v776
    %v779 = vmul.f32 %v777, %v777
    %v780 = vmul.f32 %v778, %v778
    %v781 = vsel %vm166, %v779, 0.0
    %782 = vadd.xlane.f32.xlu0 %v781
    %v783 = vpop.xlane.xlu0 %782
    %v784 = vsel %vm166, %v780, 0.0
    %785 = vadd.xlane.f32.xlu0 %v784
    %v786 = vpop.xlane.xlu0 %785
    %v787 = vmul.f32 %v783, %v179
    %v788 = vmul.f32 %v786, %v179
    %v789 = vadd.f32 %v787, 1e-12
    %v790 = vadd.f32 %v788, 1e-12
    %v791 = vrsqrt.pop %v789
    %v792 = vmul.f32 %v791, %v789
    %v793 = vmul.f32 %v792, %v791
    %v794 = vmul.f32 0.5, %v793
    %v795 = vsub.f32 1.5, %v794
    %v796 = vmul.f32 %v791, %v795
    %vm797 = vweird.f32 %v789
    %vm798 = vweird.f32 %v791
    %vm799 = vmor %vm797, %vm798
    %v800 = vsel %vm799, %v791, %v796
    %v801 = vrsqrt.pop %v790
    %v802 = vmul.f32 %v801, %v790
    %v803 = vmul.f32 %v802, %v801
    %v804 = vmul.f32 0.5, %v803
    %v805 = vsub.f32 1.5, %v804
    %v806 = vmul.f32 %v801, %v805
    %vm807 = vweird.f32 %v790
    %vm808 = vweird.f32 %v801
    %vm809 = vmor %vm807, %vm808
    %v810 = vsel %vm809, %v801, %v806
    %v811 = vmul.f32 %v777, %v800
    %v812 = vmul.f32 %v778, %v810
    %v814 = vperm.slane %v767, 0
    %v816 = vmul.f32 %v811, %v814
    %v817 = vmul.f32 %v812, %v814
    %v819 = vperm.slane %v768, 0
    %v821 = vadd.f32 %v816, %v819
    %v822 = vadd.f32 %v817, %v819
    %s823 = scalar_lea.vmem %s8, 32
    %v824 = vld [vmem:[%s823] sm:$0xff]
    %v825 = vld [vmem:[%s823 + $0x8] sm:$0xff]
    %v826 = vld [vmem:[%s823 + $0x10] sm:$0xff]
    %v827 = vld [vmem:[%s823 + $0x18] sm:$0xff]
    %s828 = scalar_lea.vmem %s9, 1
    %v829 = vld [vmem:[%s828] sm:$0x1]
    %v831 = vperm.slane %v829, 0
    %v834 = vsel %vm166, %v821, 0
    %v837 = vsel %vm166, %v822, 0
    %839 = vmatpush.msra.mxu0 0.0
    %840 = vmatpush.msra.mxu0 0.0
    %841 = vmatpush.msra.mxu0 0.0
    %842 = vmatpush.msra.mxu0 0.0
    %843 = vmatpush.msra.mxu0 0.0
    %844 = vmatpush.msra.mxu0 0.0
    %845 = vmatpush.msra.mxu0 0.0
    %846 = vmatpush.msra.mxu0 0.0
    %847 = vmatpush.msra.mxu0 0.0
    %848 = vmatpush.msra.mxu0 0.0
    %849 = vmatpush.msra.mxu0 0.0
    %850 = vmatpush.msra.mxu0 0.0
    %851 = vmatpush.msra.mxu0 %v827
    %852 = vmatpush.msra.mxu0 %v826
    %853 = vmatpush.msra.mxu0 %v825
    %854 = vmatpush.msra.mxu0 %v824
    %855 = vmatmul.f32.gmra.mxu0 %v834
    %v856 = vpop.f32.mrf.mxu0
    %v857 = vadd.f32 %v831, %v856
    %858 = vmatmul.f32.gmra.mxu0 %v837
    %v859 = vpop.f32.mrf.mxu0
    %v860 = vadd.f32 %v831, %v859
    %861 = vdwg.mxu0
    %s862 = scalar_lea.vmem %s10, 32
    %v863 = vld [vmem:[%s862] sm:$0xff]
    %v864 = vld [vmem:[%s862 + $0x8] sm:$0xff]
    %v865 = vld [vmem:[%s862 + $0x10] sm:$0xff]
    %v866 = vld [vmem:[%s862 + $0x18] sm:$0xff]
    %868 = vrot.lane.b32.xlu0 %v857, 96
    %v869 = vpop.permute.xlu0 %868
    %v870 = vsel %vm277, %v857, 0
    %v872 = vsel %vm277, %v869, 0
    %874 = vmatpush.xpose.msra.mxu0 0.0
    %875 = vmatpush.xpose.msra.mxu0 0.0
    %876 = vmatpush.xpose.msra.mxu0 0.0
    %877 = vmatpush.xpose.msra.mxu0 0.0
    %878 = vmatpush.xpose.msra.mxu0 0.0
    %879 = vmatpush.xpose.msra.mxu0 0.0
    %880 = vmatpush.xpose.msra.mxu0 0.0
    %881 = vmatpush.xpose.msra.mxu0 0.0
    %882 = vmatpush.xpose.msra.mxu0 0.0
    %883 = vmatpush.xpose.msra.mxu0 0.0
    %884 = vmatpush.xpose.msra.mxu0 0.0
    %885 = vmatpush.xpose.msra.mxu0 0.0
    %886 = vmatpush.xpose.msra.mxu0 0.0
    %887 = vmatpush.xpose.msra.mxu0 0.0
    %888 = vmatpush.xpose.msra.mxu0 0.0
    %889 = vmatpush.xpose.msra.mxu0 %v872
    %890 = vmatmul.f32.gmra.mxu0 %v870
    %v891 = vpop.f32.mrf.mxu0
    %v892 = vadd.f32 0.0, %v891
    %893 = vdwg.mxu0
    %895 = vrot.lane.b32.xlu0 %v860, 96
    %v896 = vpop.permute.xlu0 %895
    %v897 = vsel %vm277, %v860, 0
    %v899 = vsel %vm277, %v896, 0
    %901 = vmatpush.xpose.msra.mxu0 0.0
    %902 = vmatpush.xpose.msra.mxu0 0.0
    %903 = vmatpush.xpose.msra.mxu0 0.0
    %904 = vmatpush.xpose.msra.mxu0 0.0
    %905 = vmatpush.xpose.msra.mxu0 0.0
    %906 = vmatpush.xpose.msra.mxu0 0.0
    %907 = vmatpush.xpose.msra.mxu0 0.0
    %908 = vmatpush.xpose.msra.mxu0 0.0
    %909 = vmatpush.xpose.msra.mxu0 0.0
    %910 = vmatpush.xpose.msra.mxu0 0.0
    %911 = vmatpush.xpose.msra.mxu0 0.0
    %912 = vmatpush.xpose.msra.mxu0 0.0
    %913 = vmatpush.xpose.msra.mxu0 0.0
    %914 = vmatpush.xpose.msra.mxu0 0.0
    %915 = vmatpush.xpose.msra.mxu0 0.0
    %916 = vmatpush.xpose.msra.mxu0 %v899
    %917 = vmatmul.f32.gmra.mxu0 %v897
    %v918 = vpop.f32.mrf.mxu0
    %v919 = vadd.f32 0.0, %v918
    %920 = vdwg.mxu0
    %v921 = vmul.f32 %v892, 0.25
    %v922 = vmul.f32 %v919, 0.25
    %v923 = vadd.f32 %v921, %v331
    %v924 = vadd.f32 %v922, %v332
    %v925 = vsel %vm337, %v923, -inf
    %926 = vmax.xlane.f32.xlu0 %v925
    %v927 = vpop.xlane.xlu0 %926
    %v928 = vsel %vm337, %v924, -inf
    %929 = vmax.xlane.f32.xlu0 %v928
    %v930 = vpop.xlane.xlu0 %929
    %v931 = vsub.f32 %v923, %v927
    %v932 = vsub.f32 %v924, %v930
    %v933 = vmul.f32 %v931, 1.442695
    %v934 = vpow.pop %v933
    %v935 = vmul.f32 %v932, 1.442695
    %v936 = vpow.pop %v935
    %v937 = vsel %vm337, %v934, 0.0
    %938 = vadd.xlane.f32.xlu0 %v937
    %v939 = vpop.xlane.xlu0 %938
    %v940 = vsel %vm337, %v936, 0.0
    %941 = vadd.xlane.f32.xlu0 %v940
    %v942 = vpop.xlane.xlu0 %941
    %v943 = vrcp.pop %v939
    %v944 = vrcp.pop %v942
    %v945 = vmul.f32 %v934, %v943
    %v946 = vmul.f32 %v936, %v944
    %947 = vrot.lane.b32.xlu0 %v857, 64
    %v948 = vpop.permute.xlu0 %947
    %v951 = vsel %vm337, %v945, 0
    %953 = vmatpush.msra.mxu0 0.0
    %954 = vmatpush.msra.mxu0 0.0
    %955 = vmatpush.msra.mxu0 0.0
    %956 = vmatpush.msra.mxu0 0.0
    %957 = vmatpush.msra.mxu0 0.0
    %958 = vmatpush.msra.mxu0 0.0
    %959 = vmatpush.msra.mxu0 0.0
    %960 = vmatpush.msra.mxu0 0.0
    %961 = vmatpush.msra.mxu0 0.0
    %962 = vmatpush.msra.mxu0 0.0
    %963 = vmatpush.msra.mxu0 0.0
    %964 = vmatpush.msra.mxu0 0.0
    %965 = vmatpush.msra.mxu0 0.0
    %966 = vmatpush.msra.mxu0 0.0
    %967 = vmatpush.msra.mxu0 0.0
    %968 = vmatpush.msra.mxu0 %v948
    %969 = vmatmul.f32.gmra.mxu0 %v951
    %v970 = vpop.f32.mrf.mxu0
    %v971 = vadd.f32 0.0, %v970
    %972 = vdwg.mxu0
    %973 = vrot.lane.b32.xlu0 %v860, 64
    %v974 = vpop.permute.xlu0 %973
    %v977 = vsel %vm337, %v946, 0
    %979 = vmatpush.msra.mxu0 0.0
    %980 = vmatpush.msra.mxu0 0.0
    %981 = vmatpush.msra.mxu0 0.0
    %982 = vmatpush.msra.mxu0 0.0
    %983 = vmatpush.msra.mxu0 0.0
    %984 = vmatpush.msra.mxu0 0.0
    %985 = vmatpush.msra.mxu0 0.0
    %986 = vmatpush.msra.mxu0 0.0
    %987 = vmatpush.msra.mxu0 0.0
    %988 = vmatpush.msra.mxu0 0.0
    %989 = vmatpush.msra.mxu0 0.0
    %990 = vmatpush.msra.mxu0 0.0
    %991 = vmatpush.msra.mxu0 0.0
    %992 = vmatpush.msra.mxu0 0.0
    %993 = vmatpush.msra.mxu0 0.0
    %994 = vmatpush.msra.mxu0 %v974
    %995 = vmatmul.f32.gmra.mxu0 %v977
    %v996 = vpop.f32.mrf.mxu0
    %v997 = vadd.f32 0.0, %v996
    %998 = vdwg.mxu0
    %999 = vrot.lane.b32.xlu0 %v857, 112
    %v1000 = vpop.permute.xlu0 %999
    %1001 = vrot.lane.b32.xlu0 %v857, 80
    %v1002 = vpop.permute.xlu0 %1001
    %v1003 = vsel %vm277, %v1000, 0
    %v1005 = vsel %vm277, %v1002, 0
    %1007 = vmatpush.xpose.msra.mxu0 0.0
    %1008 = vmatpush.xpose.msra.mxu0 0.0
    %1009 = vmatpush.xpose.msra.mxu0 0.0
    %1010 = vmatpush.xpose.msra.mxu0 0.0
    %1011 = vmatpush.xpose.msra.mxu0 0.0
    %1012 = vmatpush.xpose.msra.mxu0 0.0
    %1013 = vmatpush.xpose.msra.mxu0 0.0
    %1014 = vmatpush.xpose.msra.mxu0 0.0
    %1015 = vmatpush.xpose.msra.mxu0 0.0
    %1016 = vmatpush.xpose.msra.mxu0 0.0
    %1017 = vmatpush.xpose.msra.mxu0 0.0
    %1018 = vmatpush.xpose.msra.mxu0 0.0
    %1019 = vmatpush.xpose.msra.mxu0 0.0
    %1020 = vmatpush.xpose.msra.mxu0 0.0
    %1021 = vmatpush.xpose.msra.mxu0 0.0
    %1022 = vmatpush.xpose.msra.mxu0 %v1005
    %1023 = vmatmul.f32.gmra.mxu0 %v1003
    %v1024 = vpop.f32.mrf.mxu0
    %v1025 = vadd.f32 0.0, %v1024
    %1026 = vdwg.mxu0
    %1027 = vrot.lane.b32.xlu0 %v860, 112
    %v1028 = vpop.permute.xlu0 %1027
    %1029 = vrot.lane.b32.xlu0 %v860, 80
    %v1030 = vpop.permute.xlu0 %1029
    %v1031 = vsel %vm277, %v1028, 0
    %v1033 = vsel %vm277, %v1030, 0
    %1035 = vmatpush.xpose.msra.mxu0 0.0
    %1036 = vmatpush.xpose.msra.mxu0 0.0
    %1037 = vmatpush.xpose.msra.mxu0 0.0
    %1038 = vmatpush.xpose.msra.mxu0 0.0
    %1039 = vmatpush.xpose.msra.mxu0 0.0
    %1040 = vmatpush.xpose.msra.mxu0 0.0
    %1041 = vmatpush.xpose.msra.mxu0 0.0
    %1042 = vmatpush.xpose.msra.mxu0 0.0
    %1043 = vmatpush.xpose.msra.mxu0 0.0
    %1044 = vmatpush.xpose.msra.mxu0 0.0
    %1045 = vmatpush.xpose.msra.mxu0 0.0
    %1046 = vmatpush.xpose.msra.mxu0 0.0
    %1047 = vmatpush.xpose.msra.mxu0 0.0
    %1048 = vmatpush.xpose.msra.mxu0 0.0
    %1049 = vmatpush.xpose.msra.mxu0 0.0
    %1050 = vmatpush.xpose.msra.mxu0 %v1033
    %1051 = vmatmul.f32.gmra.mxu0 %v1031
    %v1052 = vpop.f32.mrf.mxu0
    %v1053 = vadd.f32 0.0, %v1052
    %1054 = vdwg.mxu0
    %v1055 = vmul.f32 %v1025, 0.25
    %v1056 = vmul.f32 %v1053, 0.25
    %v1057 = vadd.f32 %v1055, %v331
    %v1058 = vadd.f32 %v1056, %v332
    %v1059 = vsel %vm337, %v1057, -inf
    %1060 = vmax.xlane.f32.xlu0 %v1059
    %v1061 = vpop.xlane.xlu0 %1060
    %v1062 = vsel %vm337, %v1058, -inf
    %1063 = vmax.xlane.f32.xlu0 %v1062
    %v1064 = vpop.xlane.xlu0 %1063
    %v1065 = vsub.f32 %v1057, %v1061
    %v1066 = vsub.f32 %v1058, %v1064
    %v1067 = vmul.f32 %v1065, 1.442695
    %v1068 = vpow.pop %v1067
    %v1069 = vmul.f32 %v1066, 1.442695
    %v1070 = vpow.pop %v1069
    %v1071 = vsel %vm337, %v1068, 0.0
    %1072 = vadd.xlane.f32.xlu0 %v1071
    %v1073 = vpop.xlane.xlu0 %1072
    %v1074 = vsel %vm337, %v1070, 0.0
    %1075 = vadd.xlane.f32.xlu0 %v1074
    %v1076 = vpop.xlane.xlu0 %1075
    %v1077 = vrcp.pop %v1073
    %v1078 = vrcp.pop %v1076
    %v1079 = vmul.f32 %v1068, %v1077
    %v1080 = vmul.f32 %v1070, %v1078
    %1081 = vrot.lane.b32.xlu0 %v857, 48
    %v1082 = vpop.permute.xlu0 %1081
    %v1085 = vsel %vm337, %v1079, 0
    %1087 = vmatpush.msra.mxu0 0.0
    %1088 = vmatpush.msra.mxu0 0.0
    %1089 = vmatpush.msra.mxu0 0.0
    %1090 = vmatpush.msra.mxu0 0.0
    %1091 = vmatpush.msra.mxu0 0.0
    %1092 = vmatpush.msra.mxu0 0.0
    %1093 = vmatpush.msra.mxu0 0.0
    %1094 = vmatpush.msra.mxu0 0.0
    %1095 = vmatpush.msra.mxu0 0.0
    %1096 = vmatpush.msra.mxu0 0.0
    %1097 = vmatpush.msra.mxu0 0.0
    %1098 = vmatpush.msra.mxu0 0.0
    %1099 = vmatpush.msra.mxu0 0.0
    %1100 = vmatpush.msra.mxu0 0.0
    %1101 = vmatpush.msra.mxu0 0.0
    %1102 = vmatpush.msra.mxu0 %v1082
    %1103 = vmatmul.f32.gmra.mxu0 %v1085
    %v1104 = vpop.f32.mrf.mxu0
    %v1105 = vadd.f32 0.0, %v1104
    %1106 = vdwg.mxu0
    %1107 = vrot.lane.b32.xlu0 %v860, 48
    %v1108 = vpop.permute.xlu0 %1107
    %v1111 = vsel %vm337, %v1080, 0
    %1113 = vmatpush.msra.mxu0 0.0
    %1114 = vmatpush.msra.mxu0 0.0
    %1115 = vmatpush.msra.mxu0 0.0
    %1116 = vmatpush.msra.mxu0 0.0
    %1117 = vmatpush.msra.mxu0 0.0
    %1118 = vmatpush.msra.mxu0 0.0
    %1119 = vmatpush.msra.mxu0 0.0
    %1120 = vmatpush.msra.mxu0 0.0
    %1121 = vmatpush.msra.mxu0 0.0
    %1122 = vmatpush.msra.mxu0 0.0
    %1123 = vmatpush.msra.mxu0 0.0
    %1124 = vmatpush.msra.mxu0 0.0
    %1125 = vmatpush.msra.mxu0 0.0
    %1126 = vmatpush.msra.mxu0 0.0
    %1127 = vmatpush.msra.mxu0 0.0
    %1128 = vmatpush.msra.mxu0 %v1108
    %1129 = vmatmul.f32.gmra.mxu0 %v1111
    %v1130 = vpop.f32.mrf.mxu0
    %v1131 = vadd.f32 0.0, %v1130
    %1132 = vdwg.mxu0
    %v1134 = vsel %vm277, %v1105, 0
    %v1137 = vsel %vm277, %v1131, 0
    %1139 = vmatpush.msra.mxu0 0.0
    %1140 = vmatpush.msra.mxu0 0.0
    %1141 = vmatpush.msra.mxu0 0.0
    %1142 = vmatpush.msra.mxu0 0.0
    %1143 = vmatpush.msra.mxu0 0.0
    %1144 = vmatpush.msra.mxu0 0.0
    %1145 = vmatpush.msra.mxu0 0.0
    %1146 = vmatpush.msra.mxu0 0.0
    %1147 = vmatpush.msra.mxu0 0.0
    %1148 = vmatpush.msra.mxu0 0.0
    %1149 = vmatpush.msra.mxu0 0.0
    %1150 = vmatpush.msra.mxu0 0.0
    %1151 = vmatpush.msra.mxu0 0.0
    %1152 = vmatpush.msra.mxu0 0.0
    %1153 = vmatpush.msra.mxu0 %v866
    %1154 = vmatpush.msra.mxu0 %v865
    %1155 = vmatmul.f32.gmra.mxu0 %v1134
    %v1156 = vpop.f32.mrf.mxu0
    %v1157 = vadd.f32 0.0, %v1156
    %1158 = vmatmul.f32.gmra.mxu0 %v1137
    %v1159 = vpop.f32.mrf.mxu0
    %v1160 = vadd.f32 0.0, %v1159
    %1161 = vdwg.mxu0
    %v1163 = vsel %vm277, %v971, 0
    %v1166 = vsel %vm277, %v997, 0
    %1168 = vmatpush.msra.mxu0 0.0
    %1169 = vmatpush.msra.mxu0 0.0
    %1170 = vmatpush.msra.mxu0 0.0
    %1171 = vmatpush.msra.mxu0 0.0
    %1172 = vmatpush.msra.mxu0 0.0
    %1173 = vmatpush.msra.mxu0 0.0
    %1174 = vmatpush.msra.mxu0 0.0
    %1175 = vmatpush.msra.mxu0 0.0
    %1176 = vmatpush.msra.mxu0 0.0
    %1177 = vmatpush.msra.mxu0 0.0
    %1178 = vmatpush.msra.mxu0 0.0
    %1179 = vmatpush.msra.mxu0 0.0
    %1180 = vmatpush.msra.mxu0 0.0
    %1181 = vmatpush.msra.mxu0 0.0
    %1182 = vmatpush.msra.mxu0 %v864
    %1183 = vmatpush.msra.mxu0 %v863
    %1184 = vmatmul.f32.gmra.mxu0 %v1163
    %v1185 = vpop.f32.mrf.mxu0
    %v1186 = vadd.f32 %v1157, %v1185
    %1187 = vmatmul.f32.gmra.mxu0 %v1166
    %v1188 = vpop.f32.mrf.mxu0
    %v1189 = vadd.f32 %v1160, %v1188
    %1190 = vdwg.mxu0
    %s1191 = scalar_lea.vmem %s11, 1
    %v1192 = vld [vmem:[%s1191] sm:$0x1]
    %v1194 = vperm.slane %v1192, 0
    %v1196 = vadd.f32 %v1186, %v1194
    %v1197 = vadd.f32 %v1189, %v1194
    %v1198 = vadd.f32 %v821, %v1196
    %v1199 = vadd.f32 %v822, %v1197
    %s1200 = scalar_lea.vmem %s12, 1
    %v1201 = vld [vmem:[%s1200] sm:$0x1]
    %s1202 = scalar_lea.vmem %s13, 1
    %v1203 = vld [vmem:[%s1202] sm:$0x1]
    %v1204 = vsel %vm166, %v1198, 0.0
    %1205 = vadd.xlane.f32.xlu0 %v1204
    %v1206 = vpop.xlane.xlu0 %1205
    %v1207 = vsel %vm166, %v1199, 0.0
    %1208 = vadd.xlane.f32.xlu0 %v1207
    %v1209 = vpop.xlane.xlu0 %1208
    %v1210 = vmul.f32 %v1206, %v179
    %v1211 = vmul.f32 %v1209, %v179
    %v1212 = vsub.f32 %v1198, %v1210
    %v1213 = vsub.f32 %v1199, %v1211
    %v1214 = vmul.f32 %v1212, %v1212
    %v1215 = vmul.f32 %v1213, %v1213
    %v1216 = vsel %vm166, %v1214, 0.0
    %1217 = vadd.xlane.f32.xlu0 %v1216
    %v1218 = vpop.xlane.xlu0 %1217
    %v1219 = vsel %vm166, %v1215, 0.0
    %1220 = vadd.xlane.f32.xlu0 %v1219
    %v1221 = vpop.xlane.xlu0 %1220
    %v1222 = vmul.f32 %v1218, %v179
    %v1223 = vmul.f32 %v1221, %v179
    %v1224 = vadd.f32 %v1222, 1e-12
    %v1225 = vadd.f32 %v1223, 1e-12
    %v1226 = vrsqrt.pop %v1224
    %v1227 = vmul.f32 %v1226, %v1224
    %v1228 = vmul.f32 %v1227, %v1226
    %v1229 = vmul.f32 0.5, %v1228
    %v1230 = vsub.f32 1.5, %v1229
    %v1231 = vmul.f32 %v1226, %v1230
    %vm1232 = vweird.f32 %v1224
    %vm1233 = vweird.f32 %v1226
    %vm1234 = vmor %vm1232, %vm1233
    %v1235 = vsel %vm1234, %v1226, %v1231
    %v1236 = vrsqrt.pop %v1225
    %v1237 = vmul.f32 %v1236, %v1225
    %v1238 = vmul.f32 %v1237, %v1236
    %v1239 = vmul.f32 0.5, %v1238
    %v1240 = vsub.f32 1.5, %v1239
    %v1241 = vmul.f32 %v1236, %v1240
    %vm1242 = vweird.f32 %v1225
    %vm1243 = vweird.f32 %v1236
    %vm1244 = vmor %vm1242, %vm1243
    %v1245 = vsel %vm1244, %v1236, %v1241
    %v1246 = vmul.f32 %v1212, %v1235
    %v1247 = vmul.f32 %v1213, %v1245
    %v1249 = vperm.slane %v1201, 0
    %v1251 = vmul.f32 %v1246, %v1249
    %v1252 = vmul.f32 %v1247, %v1249
    %v1254 = vperm.slane %v1203, 0
    %v1256 = vadd.f32 %v1251, %v1254
    %v1257 = vadd.f32 %v1252, %v1254
    %s1258 = scalar_lea.vmem %s14, 32
    %v1259 = vld [vmem:[%s1258] sm:$0xff]
    %v1260 = vld [vmem:[%s1258 + $0x8] sm:$0xff]
    %v1261 = vld [vmem:[%s1258 + $0x10] sm:$0xff]
    %v1262 = vld [vmem:[%s1258 + $0x18] sm:$0xff]
    %s1263 = scalar_lea.vmem %s15, 1
    %v1264 = vld [vmem:[%s1263] sm:$0x1]
    %v1266 = vperm.slane %v1264, 0
    %v1269 = vsel %vm166, %v1256, 0
    %v1272 = vsel %vm166, %v1257, 0
    %1274 = vmatpush.msra.mxu0 0.0
    %1275 = vmatpush.msra.mxu0 0.0
    %1276 = vmatpush.msra.mxu0 0.0
    %1277 = vmatpush.msra.mxu0 0.0
    %1278 = vmatpush.msra.mxu0 0.0
    %1279 = vmatpush.msra.mxu0 0.0
    %1280 = vmatpush.msra.mxu0 0.0
    %1281 = vmatpush.msra.mxu0 0.0
    %1282 = vmatpush.msra.mxu0 0.0
    %1283 = vmatpush.msra.mxu0 0.0
    %1284 = vmatpush.msra.mxu0 0.0
    %1285 = vmatpush.msra.mxu0 0.0
    %1286 = vmatpush.msra.mxu0 %v1262
    %1287 = vmatpush.msra.mxu0 %v1261
    %1288 = vmatpush.msra.mxu0 %v1260
    %1289 = vmatpush.msra.mxu0 %v1259
    %1290 = vmatmul.f32.gmra.mxu0 %v1269
    %v1291 = vpop.f32.mrf.mxu0
    %v1292 = vadd.f32 %v1266, %v1291
    %1293 = vmatmul.f32.gmra.mxu0 %v1272
    %v1294 = vpop.f32.mrf.mxu0
    %v1295 = vadd.f32 %v1266, %v1294
    %1296 = vdwg.mxu0
    %v1297 = vmul.f32 %v1292, 0.5
    %v1298 = vmul.f32 %v1295, 0.5
    %v1299 = vmul.f32 %v1292, 0.044715
    %v1300 = vmul.f32 %v1295, 0.044715
    %v1301 = vmul.f32 %v1299, %v1292
    %v1302 = vmul.f32 %v1300, %v1295
    %v1303 = vmul.f32 %v1301, %v1292
    %v1304 = vmul.f32 %v1302, %v1295
    %v1305 = vadd.f32 %v1292, %v1303
    %v1306 = vadd.f32 %v1295, %v1304
    %v1307 = vmul.f32 %v1305, 0.7978846
    %v1308 = vmul.f32 %v1306, 0.7978846
    %v1309 = vtanh.pop %v1307
    %v1310 = vtanh.pop %v1308
    %v1311 = vadd.f32 %v1309, 1.0
    %v1312 = vadd.f32 %v1310, 1.0
    %v1313 = vmul.f32 %v1297, %v1311
    %v1314 = vmul.f32 %v1298, %v1312
    %s1315 = scalar_lea.vmem %s16, 64
    %v1316 = vld [vmem:[%s1315] sm:$0xff]
    %v1317 = vld [vmem:[%s1315 + $0x8] sm:$0xff]
    %v1318 = vld [vmem:[%s1315 + $0x10] sm:$0xff]
    %v1319 = vld [vmem:[%s1315 + $0x18] sm:$0xff]
    %v1320 = vld [vmem:[%s1315 + $0x20] sm:$0xff]
    %v1321 = vld [vmem:[%s1315 + $0x28] sm:$0xff]
    %v1322 = vld [vmem:[%s1315 + $0x30] sm:$0xff]
    %v1323 = vld [vmem:[%s1315 + $0x38] sm:$0xff]
    %s1324 = scalar_lea.vmem %s17, 1
    %v1325 = vld [vmem:[%s1324] sm:$0x1]
    %v1327 = vperm.slane %v1325, 0
    %v1330 = vsel %vm735, %v1313, 0
    %v1333 = vsel %vm735, %v1314, 0
    %1335 = vmatpush.msra.mxu0 0.0
    %1336 = vmatpush.msra.mxu0 0.0
    %1337 = vmatpush.msra.mxu0 0.0
    %1338 = vmatpush.msra.mxu0 0.0
    %1339 = vmatpush.msra.mxu0 0.0
    %1340 = vmatpush.msra.mxu0 0.0
    %1341 = vmatpush.msra.mxu0 0.0
    %1342 = vmatpush.msra.mxu0 0.0
    %1343 = vmatpush.msra.mxu0 %v1323
    %1344 = vmatpush.msra.mxu0 %v1322
    %1345 = vmatpush.msra.mxu0 %v1321
    %1346 = vmatpush.msra.mxu0 %v1320
    %1347 = vmatpush.msra.mxu0 %v1319
    %1348 = vmatpush.msra.mxu0 %v1318
    %1349 = vmatpush.msra.mxu0 %v1317
    %1350 = vmatpush.msra.mxu0 %v1316
    %1351 = vmatmul.f32.gmra.mxu0 %v1330
    %v1352 = vpop.f32.mrf.mxu0
    %v1353 = vadd.f32 %v1327, %v1352
    %1354 = vmatmul.f32.gmra.mxu0 %v1333
    %v1355 = vpop.f32.mrf.mxu0
    %v1356 = vadd.f32 %v1327, %v1355
    %1357 = vdwg.mxu0
    %v1358 = vadd.f32 %v1256, %v1353
    %v1359 = vadd.f32 %v1257, %v1356
    %s1360 = scalar_lea.vmem %s18, 1
    %v1361 = vld [vmem:[%s1360] sm:$0x1]
    %s1362 = scalar_lea.vmem %s19, 1
    %v1363 = vld [vmem:[%s1362] sm:$0x1]
    %v1364 = vsel %vm166, %v1358, 0.0
    %1365 = vadd.xlane.f32.xlu0 %v1364
    %v1366 = vpop.xlane.xlu0 %1365
    %v1367 = vsel %vm166, %v1359, 0.0
    %1368 = vadd.xlane.f32.xlu0 %v1367
    %v1369 = vpop.xlane.xlu0 %1368
    %v1370 = vmul.f32 %v1366, %v179
    %v1371 = vmul.f32 %v1369, %v179
    %v1372 = vsub.f32 %v1358, %v1370
    %v1373 = vsub.f32 %v1359, %v1371
    %v1374 = vmul.f32 %v1372, %v1372
    %v1375 = vmul.f32 %v1373, %v1373
    %v1376 = vsel %vm166, %v1374, 0.0
    %1377 = vadd.xlane.f32.xlu0 %v1376
    %v1378 = vpop.xlane.xlu0 %1377
    %v1379 = vsel %vm166, %v1375, 0.0
    %1380 = vadd.xlane.f32.xlu0 %v1379
    %v1381 = vpop.xlane.xlu0 %1380
    %v1382 = vmul.f32 %v1378, %v179
    %v1383 = vmul.f32 %v1381, %v179
    %v1384 = vadd.f32 %v1382, 1e-12
    %v1385 = vadd.f32 %v1383, 1e-12
    %v1386 = vrsqrt.pop %v1384
    %v1387 = vmul.f32 %v1386, %v1384
    %v1388 = vmul.f32 %v1387, %v1386
    %v1389 = vmul.f32 0.5, %v1388
    %v1390 = vsub.f32 1.5, %v1389
    %v1391 = vmul.f32 %v1386, %v1390
    %vm1392 = vweird.f32 %v1384
    %vm1393 = vweird.f32 %v1386
    %vm1394 = vmor %vm1392, %vm1393
    %v1395 = vsel %vm1394, %v1386, %v1391
    %v1396 = vrsqrt.pop %v1385
    %v1397 = vmul.f32 %v1396, %v1385
    %v1398 = vmul.f32 %v1397, %v1396
    %v1399 = vmul.f32 0.5, %v1398
    %v1400 = vsub.f32 1.5, %v1399
    %v1401 = vmul.f32 %v1396, %v1400
    %vm1402 = vweird.f32 %v1385
    %vm1403 = vweird.f32 %v1396
    %vm1404 = vmor %vm1402, %vm1403
    %v1405 = vsel %vm1404, %v1396, %v1401
    %v1406 = vmul.f32 %v1372, %v1395
    %v1407 = vmul.f32 %v1373, %v1405
    %v1409 = vperm.slane %v1361, 0
    %v1411 = vmul.f32 %v1406, %v1409
    %v1412 = vmul.f32 %v1407, %v1409
    %v1414 = vperm.slane %v1363, 0
    %v1416 = vadd.f32 %v1411, %v1414
    %v1417 = vadd.f32 %v1412, %v1414
    %v1418 = vld [vmem:[%s20] sm:$0xff]
    %v1419 = vld [vmem:[%s20 + $0x8] sm:$0xff]
    %v1420 = vld [vmem:[%s20 + $0x10] sm:$0xff]
    %v1421 = vld [vmem:[%s20 + $0x18] sm:$0xff]
    %v1422 = vld [vmem:[%s21] sm:$0x1]
    %v1424 = vperm.slane %v1422, 0
    %v1428 = vrot.slane %v1417, 7
    %vm1429 = vcmask 1041409
    %v1430 = vsel %vm1429, %v1428, %v1416
    %v1431 = vsel %vm166, %v1430, 0
    %1433 = vmatpush.msra.mxu0 0.0
    %1434 = vmatpush.msra.mxu0 0.0
    %1435 = vmatpush.msra.mxu0 0.0
    %1436 = vmatpush.msra.mxu0 0.0
    %1437 = vmatpush.msra.mxu0 0.0
    %1438 = vmatpush.msra.mxu0 0.0
    %1439 = vmatpush.msra.mxu0 0.0
    %1440 = vmatpush.msra.mxu0 0.0
    %1441 = vmatpush.msra.mxu0 0.0
    %1442 = vmatpush.msra.mxu0 0.0
    %1443 = vmatpush.msra.mxu0 0.0
    %1444 = vmatpush.msra.mxu0 0.0
    %1445 = vmatpush.msra.mxu0 %v1421
    %1446 = vmatpush.msra.mxu0 %v1420
    %1447 = vmatpush.msra.mxu0 %v1419
    %1448 = vmatpush.msra.mxu0 %v1418
    %1449 = vmatmul.f32.gmra.mxu0 %v1431
    %v1450 = vpop.f32.mrf.mxu0
    %v1451 = vadd.f32 %v1424, %v1450
    %1452 = vdwg.mxu0
    %v1453 = vtanh.pop %v1451
    %v1454 = vld [vmem:[%s22] sm:$0xff]
    %v1455 = vld [vmem:[%s22 + $0x8] sm:$0xff]
    %v1456 = vld [vmem:[%s22 + $0x10] sm:$0xff]
    %v1457 = vld [vmem:[%s22 + $0x18] sm:$0xff]
    %v1458 = vld [vmem:[%s23] sm:$0x1]
    %v1460 = vperm.slane %v1458, 0
    %v1463 = vsel %vm166, %v1453, 0
    %1465 = vmatpush.msra.mxu0 0.0
    %1466 = vmatpush.msra.mxu0 0.0
    %1467 = vmatpush.msra.mxu0 0.0
    %1468 = vmatpush.msra.mxu0 0.0
    %1469 = vmatpush.msra.mxu0 0.0
    %1470 = vmatpush.msra.mxu0 0.0
    %1471 = vmatpush.msra.mxu0 0.0
    %1472 = vmatpush.msra.mxu0 0.0
    %1473 = vmatpush.msra.mxu0 0.0
    %1474 = vmatpush.msra.mxu0 0.0
    %1475 = vmatpush.msra.mxu0 0.0
    %1476 = vmatpush.msra.mxu0 0.0
    %1477 = vmatpush.msra.mxu0 %v1457
    %1478 = vmatpush.msra.mxu0 %v1456
    %1479 = vmatpush.msra.mxu0 %v1455
    %1480 = vmatpush.msra.mxu0 %v1454
    %1481 = vmatmul.f32.gmra.mxu0 %v1463
    %v1482 = vpop.f32.mrf.mxu0
    %v1483 = vadd.f32 %v1460, %v1482
    %1484 = vdwg.mxu0
    %vm1485 = vcmask 99328
    %1486 = vst.msk [vmem:[#allocation2] sm:$0x3] %vm1485, %v1483
    // Predicated region
    $region98: #{tpu_custom_call.1} parent=1 // pred_check
      _
    $region99: #{tpu_custom_call.1} parent=1 // pred_check_branch
      %1488 = sbr.rel (0) target = $region101
    $region100: #{tpu_custom_call.1} parent=1 // pred_region
      %1490 = vsyncadd [#allocation3], 0
      %s1492 = sshll.u32 [#allocation2], 4
      %s1493 = int_to_ptr.vmem [resolvable:$true] %s1492
      %s1494 = sshll.u32 %s24, 4
      %s1495 = int_to_ptr.hbm [resolvable:$true] %s1494
      %1497 = dma.vmem_to_hbm [thread:$0]  %s1493, 32, %s1495, [#allocation3]
    $region101: #{tpu_custom_call.1} parent=1 // pred_fallthru
      _
    // Predicated region
    $region102: #{tpu_custom_call.1} parent=1 // pred_check
      _
    $region103: #{tpu_custom_call.1} parent=1 // pred_check_branch
      %1499 = sbr.rel (0) target = $region105
    $region104: #{tpu_custom_call.1} parent=1 // pred_region
      %1501 = dma.done [#allocation3], 32
    $region105: #{tpu_custom_call.1} parent=1 // pred_fallthru
      _
    %1502 = vsyncpa [#allocation3], 1

</llo_original>
